<compile_context>
chip_gen: v7x
topology: tpu7x:2x2x1
jax: 0.10.0
libtpu: 0.0.40
codegen_flags: <defaults>
</compile_context>

<pallas_src>
import functools

import jax
import jax.numpy as jnp
from jax.experimental import pallas as pl
from jax.experimental.pallas import tpu as pltpu


def _ggnn_kernel(num_steps, bt, n,
                 x_ref, adj_ref,
                 w_in_ref, b_in_ref,
                 w_h2_ref, w_m3_ref, wh_r_ref,
                 b_ur_ref, bh_ref,
                 out_ref):
    h_dim = wh_r_ref.shape[0]
    rows = bt * n

    # ---- Hoist all loop-invariant loads / broadcasts out of the step loop ----
    adj = adj_ref[...]                         # (BT, N, N)  bf16
    w_in = w_in_ref[...]                       # (Din, H)    bf16
    w_h2 = w_h2_ref[...]                       # (H, 2H)     bf16
    w_m3 = w_m3_ref[...]                       # (H, 3H)     bf16
    wh_r = wh_r_ref[...]                       # (H, H)      bf16
    b_in = jnp.broadcast_to(b_in_ref[...], (rows, h_dim))        # f32
    b_ur = jnp.broadcast_to(b_ur_ref[...], (rows, 2 * h_dim))    # f32
    bh = jnp.broadcast_to(bh_ref[...], (rows, h_dim))            # f32

    # hidden_states = input_transform(node_features)   -> (BT*N, H), f32
    x = x_ref[...].reshape(rows, x_ref.shape[-1]).astype(jnp.bfloat16)
    h = jnp.dot(x, w_in, preferred_element_type=jnp.float32) + b_in

    def step(h):
        hb = h.astype(jnp.bfloat16)
        # messages = bmm(adj, h): per-graph batched matmul on the MXU.
        m = jnp.einsum("bij,bjh->bih", adj, hb.reshape(bt, n, h_dim),
                       preferred_element_type=jnp.float32).reshape(rows, h_dim)
        mb = m.astype(jnp.bfloat16)

        # Fused gate matmuls: h @ [Wu_h | Wr_h],  m @ [Wu_m | Wr_m | Wh_m].
        gh = jnp.dot(hb, w_h2, preferred_element_type=jnp.float32)   # (rows, 2H)
        gm = jnp.dot(mb, w_m3, preferred_element_type=jnp.float32)   # (rows, 3H)

        ur = jax.nn.sigmoid(gh + gm[:, :2 * h_dim] + b_ur)
        u = ur[:, :h_dim]            # update gate
        r = ur[:, h_dim:]            # reset gate

        cand = jnp.tanh(
            jnp.dot((r * h).astype(jnp.bfloat16), wh_r,
                    preferred_element_type=jnp.float32)
            + gm[:, 2 * h_dim:] + bh)

        # dropout: identity in eval mode
        return u * h + (1.0 - u) * cand

    if num_steps <= 4:
        for _ in range(num_steps):           # full unroll for small step counts
            h = step(h)
    else:
        # Cap code size / vreg pressure for long propagation.
        h = jax.lax.fori_loop(0, num_steps, lambda _, hh: step(hh), h, unroll=2)

    out_ref[...] = h.reshape(bt, n, h_dim).astype(out_ref.dtype)


def ggnn_forward(node_features, adj_matrix, params, num_steps,
                 graphs_per_block=None):
    B, N, Din = node_features.shape
    H = params["w_in"].shape[1]

    if graphs_per_block is None:
        # Largest divisor of B that still leaves >= 2 grid steps, so the
        # "parallel" batch axis can be split across TensorCores.
        candidates = [d for d in range(1, B + 1) if B % d == 0 and B // d >= 2]
        graphs_per_block = max(candidates) if candidates else B
    BT = graphs_per_block
    assert B % BT == 0, "graphs_per_block must divide the batch size"
    grid = (B // BT,)

    # ---- Fuse / pack weights once in the wrapper (bf16 MXU operands) --------
    bf16, f32 = jnp.bfloat16, jnp.float32
    w_in = params["w_in"].astype(bf16)
    w_h2 = jnp.concatenate([params["wu_h"], params["wr_h"]], axis=1).astype(bf16)
    w_m3 = jnp.concatenate(
        [params["wu_m"], params["wr_m"], params["wh_m"]], axis=1).astype(bf16)
    wh_r = params["wh_r"].astype(bf16)
    b_in = params["b_in"].astype(f32)
    b_ur = jnp.concatenate([params["bu"], params["br"]], axis=1).astype(f32)
    bh = params["bh"].astype(f32)
    adj_bf16 = adj_matrix.astype(bf16)        # 0/1 exact; halves adjacency DMA

    kernel = functools.partial(_ggnn_kernel, num_steps, BT, N)

    def batched(shape):
        nd = len(shape)
        return pl.BlockSpec(shape, lambda g, _nd=nd: (g,) + (0,) * (_nd - 1))

    def shared(shape):
        nd = len(shape)
        return pl.BlockSpec(shape, lambda g, _nd=nd: (0,) * _nd)

    in_specs = [
        batched((BT, N, Din)),        # node_features
        batched((BT, N, N)),          # adj_matrix (bf16)
        shared(w_in.shape),           # (Din, H)
        shared(b_in.shape),           # (1, H)
        shared(w_h2.shape),           # (H, 2H)
        shared(w_m3.shape),           # (H, 3H)
        shared(wh_r.shape),           # (H, H)
        shared(b_ur.shape),           # (1, 2H)
        shared(bh.shape),             # (1, H)
    ]

    return pl.pallas_call(
        kernel,
        out_shape=jax.ShapeDtypeStruct((B, N, H), jnp.float32),
        grid_spec=pltpu.PrefetchScalarGridSpec(
            num_scalar_prefetch=0,
            grid=grid,
            in_specs=in_specs,
            out_specs=batched((BT, N, H)),
        ),
        compiler_params=pltpu.CompilerParams(
            dimension_semantics=("parallel",)),
    )(node_features, adj_bf16,
      w_in, b_in, w_h2, w_m3, wh_r, b_ur, bh)


def ggnn_reference(node_features, adj_matrix, params, num_steps):
    """Pure-JAX f32 reference mirroring the PyTorch module (eval mode)."""
    h = node_features @ params["w_in"] + params["b_in"]
    for _ in range(num_steps):
        m = jnp.einsum("bij,bjh->bih", adj_matrix, h)
        u = jax.nn.sigmoid(h @ params["wu_h"] + m @ params["wu_m"] + params["bu"])
        r = jax.nn.sigmoid(h @ params["wr_h"] + m @ params["wr_m"] + params["br"])
        cand = jnp.tanh((r * h) @ params["wh_r"] + m @ params["wh_m"] + params["bh"])
        h = u * h + (1.0 - u) * cand
    return h


def init_params(key, input_dim, hidden_dim):
    """Deterministic init matching PyTorch Linear shapes (weights stored transposed)."""
    keys = jax.random.split(key, 4)

    def linear(k, fan_in, fan_out):
        bound = 1.0 / jnp.sqrt(fan_in)
        kw, kb = jax.random.split(k)
        w = jax.random.uniform(kw, (fan_in, fan_out), jnp.float32, -bound, bound)
        b = jax.random.uniform(kb, (1, fan_out), jnp.float32, -bound, bound)
        return w, b

    H = hidden_dim
    w_in, b_in = linear(keys[0], input_dim, H)
    # Linear(2H -> H): combined = cat([h, m], -1), so rows [:H] act on h (or on
    # reset_hidden for the hidden transform) and rows [H:] act on the messages.
    wu, bu = linear(keys[1], 2 * H, H)
    wr, br = linear(keys[2], 2 * H, H)
    wh, bh = linear(keys[3], 2 * H, H)
    return {
        "w_in": w_in, "b_in": b_in,
        "wu_h": wu[:H], "wu_m": wu[H:], "bu": bu,
        "wr_h": wr[:H], "wr_m": wr[H:], "br": br,
        "wh_r": wh[:H], "wh_m": wh[H:], "bh": bh,
    }


if __name__ == "__main__":
    B, N, DIN, H = 8, 8, 16, 32
    NUM_STEPS = 3

    key = jax.random.PRNGKey(0)
    k_x, k_adj, k_p = jax.random.split(key, 3)

    node_features = jax.random.normal(k_x, (B, N, DIN), jnp.float32)
    adj_logits = jax.random.uniform(k_adj, (B, N, N), jnp.float32)
    adj_matrix = (adj_logits > 0.5).astype(jnp.float32)

    params = init_params(k_p, DIN, H)

    out = ggnn_forward(node_features, adj_matrix, params, NUM_STEPS)
    out = jax.block_until_ready(out)

    ref = ggnn_reference(node_features, adj_matrix, params, NUM_STEPS)
    assert out.shape == (B, N, H)
    # bf16 MXU operands with f32 accumulation => loosened tolerance vs f32 ref.
    assert jnp.allclose(out, ref, atol=2e-2, rtol=2e-2), "mismatch vs JAX reference"

    print("KERNEL_OK")
</pallas_src>

<mosaic_0001>
module attributes {stable_mosaic.version = 11 : i64} {
  func.func @_ggnn_kernel(%arg0: i32, %arg1: memref<4x8x16xf32, #tpu.memory_space<vmem>>, %arg2: memref<4x8x8xbf16, #tpu.memory_space<vmem>>, %arg3: memref<16x32xbf16, #tpu.memory_space<vmem>>, %arg4: memref<1x32xf32, #tpu.memory_space<vmem>>, %arg5: memref<32x64xbf16, #tpu.memory_space<vmem>>, %arg6: memref<32x96xbf16, #tpu.memory_space<vmem>>, %arg7: memref<32x32xbf16, #tpu.memory_space<vmem>>, %arg8: memref<1x64xf32, #tpu.memory_space<vmem>>, %arg9: memref<1x32xf32, #tpu.memory_space<vmem>>, %arg10: memref<4x8x32xf32, #tpu.memory_space<vmem>>) attributes {dimension_semantics = [#tpu.dimension_semantics<parallel>], iteration_bounds = array<i64: 2>, scalar_prefetch = 0 : i64, scratch_operands = 0 : i64, tpu.core_type = #tpu.core_type<tc>, window_params = [{transform_indices = @transform_0, window_bounds = array<i64: 4, 8, 16>}, {transform_indices = @transform_1, window_bounds = array<i64: 4, 8, 8>}, {pipeline_mode = #tpu.pipeline_mode<synchronous>, transform_indices = @transform_2, window_bounds = array<i64: 16, 32>}, {pipeline_mode = #tpu.pipeline_mode<synchronous>, transform_indices = @transform_3, window_bounds = array<i64: 1, 32>}, {pipeline_mode = #tpu.pipeline_mode<synchronous>, transform_indices = @transform_4, window_bounds = array<i64: 32, 64>}, {pipeline_mode = #tpu.pipeline_mode<synchronous>, transform_indices = @transform_5, window_bounds = array<i64: 32, 96>}, {pipeline_mode = #tpu.pipeline_mode<synchronous>, transform_indices = @transform_6, window_bounds = array<i64: 32, 32>}, {pipeline_mode = #tpu.pipeline_mode<synchronous>, transform_indices = @transform_7, window_bounds = array<i64: 1, 64>}, {pipeline_mode = #tpu.pipeline_mode<synchronous>, transform_indices = @transform_8, window_bounds = array<i64: 1, 32>}, {transform_indices = @transform_9, window_bounds = array<i64: 4, 8, 32>}]} {
    %c0 = arith.constant 0 : index
    %c0_0 = arith.constant 0 : index
    %c0_1 = arith.constant 0 : index
    %0 = vector.load %arg2[%c0, %c0_0, %c0_1] : memref<4x8x8xbf16, #tpu.memory_space<vmem>>, vector<4x8x8xbf16>
    %c0_2 = arith.constant 0 : index
    %c0_3 = arith.constant 0 : index
    %1 = vector.load %arg3[%c0_2, %c0_3] : memref<16x32xbf16, #tpu.memory_space<vmem>>, vector<16x32xbf16>
    %c0_4 = arith.constant 0 : index
    %c0_5 = arith.constant 0 : index
    %2 = vector.load %arg5[%c0_4, %c0_5] : memref<32x64xbf16, #tpu.memory_space<vmem>>, vector<32x64xbf16>
    %c0_6 = arith.constant 0 : index
    %c0_7 = arith.constant 0 : index
    %3 = vector.load %arg6[%c0_6, %c0_7] : memref<32x96xbf16, #tpu.memory_space<vmem>>, vector<32x96xbf16>
    %c0_8 = arith.constant 0 : index
    %c0_9 = arith.constant 0 : index
    %4 = vector.load %arg7[%c0_8, %c0_9] : memref<32x32xbf16, #tpu.memory_space<vmem>>, vector<32x32xbf16>
    %c0_10 = arith.constant 0 : index
    %c0_11 = arith.constant 0 : index
    %5 = vector.load %arg4[%c0_10, %c0_11] : memref<1x32xf32, #tpu.memory_space<vmem>>, vector<1x32xf32>
    %6 = vector.shape_cast %5 : vector<1x32xf32> to vector<1x32xf32>
    %7 = vector.broadcast %6 : vector<1x32xf32> to vector<32x32xf32>
    %c0_12 = arith.constant 0 : index
    %c0_13 = arith.constant 0 : index
    %8 = vector.load %arg8[%c0_12, %c0_13] : memref<1x64xf32, #tpu.memory_space<vmem>>, vector<1x64xf32>
    %9 = vector.shape_cast %8 : vector<1x64xf32> to vector<1x64xf32>
    %10 = vector.broadcast %9 : vector<1x64xf32> to vector<32x64xf32>
    %c0_14 = arith.constant 0 : index
    %c0_15 = arith.constant 0 : index
    %11 = vector.load %arg9[%c0_14, %c0_15] : memref<1x32xf32, #tpu.memory_space<vmem>>, vector<1x32xf32>
    %12 = vector.shape_cast %11 : vector<1x32xf32> to vector<1x32xf32>
    %13 = vector.broadcast %12 : vector<1x32xf32> to vector<32x32xf32>
    %c0_16 = arith.constant 0 : index
    %c0_17 = arith.constant 0 : index
    %c0_18 = arith.constant 0 : index
    %14 = vector.load %arg1[%c0_16, %c0_17, %c0_18] : memref<4x8x16xf32, #tpu.memory_space<vmem>>, vector<4x8x16xf32>
    %15 = vector.shape_cast %14 : vector<4x8x16xf32> to vector<32x16xf32>
    %16 = arith.truncf %15 : vector<32x16xf32> to vector<32x16xbf16>
    %cst = arith.constant dense<0.000000e+00> : vector<32x32xf32>
    %17 = tpu.matmul %16, %1, %cst {dimension_numbers = #tpu.dot_dimension_numbers<[1], [0], [0], [1], [0, 0, 1, 1], [], []>} : vector<32x16xbf16>, vector<16x32xbf16>, vector<32x32xf32> -> vector<32x32xf32>
    %18 = arith.addf %17, %7 : vector<32x32xf32>
    %19 = arith.truncf %18 : vector<32x32xf32> to vector<32x32xbf16>
    %20 = vector.shape_cast %19 : vector<32x32xbf16> to vector<4x8x32xbf16>
    "tpu.trace_start"() <{level = 10 : i32, message = "bij,bjh->bih"}> : () -> ()
    %cst_19 = arith.constant dense<0.000000e+00> : vector<4x8x32xf32>
    %21 = tpu.matmul %0, %20, %cst_19 {dimension_numbers = #tpu.dot_dimension_numbers<[2], [1], [1], [2], [0, 0, 0, 1, 1, 2], [0], [0]>} : vector<4x8x8xbf16>, vector<4x8x32xbf16>, vector<4x8x32xf32> -> vector<4x8x32xf32>
    "tpu.trace_stop"() : () -> ()
    %22 = vector.shape_cast %21 : vector<4x8x32xf32> to vector<32x32xf32>
    %23 = arith.truncf %22 : vector<32x32xf32> to vector<32x32xbf16>
    %cst_20 = arith.constant dense<0.000000e+00> : vector<32x64xf32>
    %24 = tpu.matmul %19, %2, %cst_20 {dimension_numbers = #tpu.dot_dimension_numbers<[1], [0], [0], [1], [0, 0, 1, 1], [], []>} : vector<32x32xbf16>, vector<32x64xbf16>, vector<32x64xf32> -> vector<32x64xf32>
    %cst_21 = arith.constant dense<0.000000e+00> : vector<32x96xf32>
    %25 = tpu.matmul %23, %3, %cst_21 {dimension_numbers = #tpu.dot_dimension_numbers<[1], [0], [0], [1], [0, 0, 1, 1], [], []>} : vector<32x32xbf16>, vector<32x96xbf16>, vector<32x96xf32> -> vector<32x96xf32>
    %26 = vector.extract_strided_slice %25 {offsets = [0, 0], sizes = [32, 64], strides = [1, 1]} : vector<32x96xf32> to vector<32x64xf32>
    %27 = arith.addf %24, %26 : vector<32x64xf32>
    %28 = arith.addf %27, %10 : vector<32x64xf32>
    %29 = arith.negf %28 : vector<32x64xf32>
    %30 = math.exp %29 : vector<32x64xf32>
    %cst_22 = arith.constant 1.000000e+00 : f32
    %31 = vector.broadcast %cst_22 : f32 to vector<32x64xf32>
    %32 = arith.addf %31, %30 : vector<32x64xf32>
    %33 = arith.divf %31, %32 : vector<32x64xf32>
    %34 = vector.extract_strided_slice %33 {offsets = [0, 0], sizes = [32, 32], strides = [1, 1]} : vector<32x64xf32> to vector<32x32xf32>
    %35 = vector.extract_strided_slice %33 {offsets = [0, 32], sizes = [32, 32], strides = [1, 1]} : vector<32x64xf32> to vector<32x32xf32>
    %36 = arith.mulf %35, %18 : vector<32x32xf32>
    %37 = arith.truncf %36 : vector<32x32xf32> to vector<32x32xbf16>
    %cst_23 = arith.constant dense<0.000000e+00> : vector<32x32xf32>
    %38 = tpu.matmul %37, %4, %cst_23 {dimension_numbers = #tpu.dot_dimension_numbers<[1], [0], [0], [1], [0, 0, 1, 1], [], []>} : vector<32x32xbf16>, vector<32x32xbf16>, vector<32x32xf32> -> vector<32x32xf32>
    %39 = vector.extract_strided_slice %25 {offsets = [0, 64], sizes = [32, 32], strides = [1, 1]} : vector<32x96xf32> to vector<32x32xf32>
    %40 = arith.addf %38, %39 : vector<32x32xf32>
    %41 = arith.addf %40, %13 : vector<32x32xf32>
    %42 = math.tanh %41 : vector<32x32xf32>
    %43 = arith.mulf %34, %18 : vector<32x32xf32>
    %cst_24 = arith.constant 1.000000e+00 : f32
    %44 = vector.broadcast %cst_24 : f32 to vector<32x32xf32>
    %45 = arith.subf %44, %34 : vector<32x32xf32>
    %46 = arith.mulf %45, %42 : vector<32x32xf32>
    %47 = arith.addf %43, %46 : vector<32x32xf32>
    %48 = arith.truncf %47 : vector<32x32xf32> to vector<32x32xbf16>
    %49 = vector.shape_cast %48 : vector<32x32xbf16> to vector<4x8x32xbf16>
    "tpu.trace_start"() <{level = 10 : i32, message = "bij,bjh->bih"}> : () -> ()
    %cst_25 = arith.constant dense<0.000000e+00> : vector<4x8x32xf32>
    %50 = tpu.matmul %0, %49, %cst_25 {dimension_numbers = #tpu.dot_dimension_numbers<[2], [1], [1], [2], [0, 0, 0, 1, 1, 2], [0], [0]>} : vector<4x8x8xbf16>, vector<4x8x32xbf16>, vector<4x8x32xf32> -> vector<4x8x32xf32>
    "tpu.trace_stop"() : () -> ()
    %51 = vector.shape_cast %50 : vector<4x8x32xf32> to vector<32x32xf32>
    %52 = arith.truncf %51 : vector<32x32xf32> to vector<32x32xbf16>
    %cst_26 = arith.constant dense<0.000000e+00> : vector<32x64xf32>
    %53 = tpu.matmul %48, %2, %cst_26 {dimension_numbers = #tpu.dot_dimension_numbers<[1], [0], [0], [1], [0, 0, 1, 1], [], []>} : vector<32x32xbf16>, vector<32x64xbf16>, vector<32x64xf32> -> vector<32x64xf32>
    %cst_27 = arith.constant dense<0.000000e+00> : vector<32x96xf32>
    %54 = tpu.matmul %52, %3, %cst_27 {dimension_numbers = #tpu.dot_dimension_numbers<[1], [0], [0], [1], [0, 0, 1, 1], [], []>} : vector<32x32xbf16>, vector<32x96xbf16>, vector<32x96xf32> -> vector<32x96xf32>
    %55 = vector.extract_strided_slice %54 {offsets = [0, 0], sizes = [32, 64], strides = [1, 1]} : vector<32x96xf32> to vector<32x64xf32>
    %56 = arith.addf %53, %55 : vector<32x64xf32>
    %57 = arith.addf %56, %10 : vector<32x64xf32>
    %58 = arith.negf %57 : vector<32x64xf32>
    %59 = math.exp %58 : vector<32x64xf32>
    %cst_28 = arith.constant 1.000000e+00 : f32
    %60 = vector.broadcast %cst_28 : f32 to vector<32x64xf32>
    %61 = arith.addf %60, %59 : vector<32x64xf32>
    %62 = arith.divf %60, %61 : vector<32x64xf32>
    %63 = vector.extract_strided_slice %62 {offsets = [0, 0], sizes = [32, 32], strides = [1, 1]} : vector<32x64xf32> to vector<32x32xf32>
    %64 = vector.extract_strided_slice %62 {offsets = [0, 32], sizes = [32, 32], strides = [1, 1]} : vector<32x64xf32> to vector<32x32xf32>
    %65 = arith.mulf %64, %47 : vector<32x32xf32>
    %66 = arith.truncf %65 : vector<32x32xf32> to vector<32x32xbf16>
    %cst_29 = arith.constant dense<0.000000e+00> : vector<32x32xf32>
    %67 = tpu.matmul %66, %4, %cst_29 {dimension_numbers = #tpu.dot_dimension_numbers<[1], [0], [0], [1], [0, 0, 1, 1], [], []>} : vector<32x32xbf16>, vector<32x32xbf16>, vector<32x32xf32> -> vector<32x32xf32>
    %68 = vector.extract_strided_slice %54 {offsets = [0, 64], sizes = [32, 32], strides = [1, 1]} : vector<32x96xf32> to vector<32x32xf32>
    %69 = arith.addf %67, %68 : vector<32x32xf32>
    %70 = arith.addf %69, %13 : vector<32x32xf32>
    %71 = math.tanh %70 : vector<32x32xf32>
    %72 = arith.mulf %63, %47 : vector<32x32xf32>
    %cst_30 = arith.constant 1.000000e+00 : f32
    %73 = vector.broadcast %cst_30 : f32 to vector<32x32xf32>
    %74 = arith.subf %73, %63 : vector<32x32xf32>
    %75 = arith.mulf %74, %71 : vector<32x32xf32>
    %76 = arith.addf %72, %75 : vector<32x32xf32>
    %77 = arith.truncf %76 : vector<32x32xf32> to vector<32x32xbf16>
    %78 = vector.shape_cast %77 : vector<32x32xbf16> to vector<4x8x32xbf16>
    "tpu.trace_start"() <{level = 10 : i32, message = "bij,bjh->bih"}> : () -> ()
    %cst_31 = arith.constant dense<0.000000e+00> : vector<4x8x32xf32>
    %79 = tpu.matmul %0, %78, %cst_31 {dimension_numbers = #tpu.dot_dimension_numbers<[2], [1], [1], [2], [0, 0, 0, 1, 1, 2], [0], [0]>} : vector<4x8x8xbf16>, vector<4x8x32xbf16>, vector<4x8x32xf32> -> vector<4x8x32xf32>
    "tpu.trace_stop"() : () -> ()
    %80 = vector.shape_cast %79 : vector<4x8x32xf32> to vector<32x32xf32>
    %81 = arith.truncf %80 : vector<32x32xf32> to vector<32x32xbf16>
    %cst_32 = arith.constant dense<0.000000e+00> : vector<32x64xf32>
    %82 = tpu.matmul %77, %2, %cst_32 {dimension_numbers = #tpu.dot_dimension_numbers<[1], [0], [0], [1], [0, 0, 1, 1], [], []>} : vector<32x32xbf16>, vector<32x64xbf16>, vector<32x64xf32> -> vector<32x64xf32>
    %cst_33 = arith.constant dense<0.000000e+00> : vector<32x96xf32>
    %83 = tpu.matmul %81, %3, %cst_33 {dimension_numbers = #tpu.dot_dimension_numbers<[1], [0], [0], [1], [0, 0, 1, 1], [], []>} : vector<32x32xbf16>, vector<32x96xbf16>, vector<32x96xf32> -> vector<32x96xf32>
    %84 = vector.extract_strided_slice %83 {offsets = [0, 0], sizes = [32, 64], strides = [1, 1]} : vector<32x96xf32> to vector<32x64xf32>
    %85 = arith.addf %82, %84 : vector<32x64xf32>
    %86 = arith.addf %85, %10 : vector<32x64xf32>
    %87 = arith.negf %86 : vector<32x64xf32>
    %88 = math.exp %87 : vector<32x64xf32>
    %cst_34 = arith.constant 1.000000e+00 : f32
    %89 = vector.broadcast %cst_34 : f32 to vector<32x64xf32>
    %90 = arith.addf %89, %88 : vector<32x64xf32>
    %91 = arith.divf %89, %90 : vector<32x64xf32>
    %92 = vector.extract_strided_slice %91 {offsets = [0, 0], sizes = [32, 32], strides = [1, 1]} : vector<32x64xf32> to vector<32x32xf32>
    %93 = vector.extract_strided_slice %91 {offsets = [0, 32], sizes = [32, 32], strides = [1, 1]} : vector<32x64xf32> to vector<32x32xf32>
    %94 = arith.mulf %93, %76 : vector<32x32xf32>
    %95 = arith.truncf %94 : vector<32x32xf32> to vector<32x32xbf16>
    %cst_35 = arith.constant dense<0.000000e+00> : vector<32x32xf32>
    %96 = tpu.matmul %95, %4, %cst_35 {dimension_numbers = #tpu.dot_dimension_numbers<[1], [0], [0], [1], [0, 0, 1, 1], [], []>} : vector<32x32xbf16>, vector<32x32xbf16>, vector<32x32xf32> -> vector<32x32xf32>
    %97 = vector.extract_strided_slice %83 {offsets = [0, 64], sizes = [32, 32], strides = [1, 1]} : vector<32x96xf32> to vector<32x32xf32>
    %98 = arith.addf %96, %97 : vector<32x32xf32>
    %99 = arith.addf %98, %13 : vector<32x32xf32>
    %100 = math.tanh %99 : vector<32x32xf32>
    %101 = arith.mulf %92, %76 : vector<32x32xf32>
    %cst_36 = arith.constant 1.000000e+00 : f32
    %102 = vector.broadcast %cst_36 : f32 to vector<32x32xf32>
    %103 = arith.subf %102, %92 : vector<32x32xf32>
    %104 = arith.mulf %103, %100 : vector<32x32xf32>
    %105 = arith.addf %101, %104 : vector<32x32xf32>
    %106 = vector.shape_cast %105 : vector<32x32xf32> to vector<4x8x32xf32>
    %c0_37 = arith.constant 0 : index
    %c0_38 = arith.constant 0 : index
    %c0_39 = arith.constant 0 : index
    %107 = vector.load %arg10[%c0_37, %c0_38, %c0_39] : memref<4x8x32xf32, #tpu.memory_space<vmem>>, vector<4x8x32xf32>
    tpu.vector_store %arg10[%c0_37, %c0_38, %c0_39], %106 {strides = array<i32>} : memref<4x8x32xf32, #tpu.memory_space<vmem>>, vector<4x8x32xf32>,
    return
  }
  func.func @transform_0(%arg0: i32) -> (i32, i32, i32) {
    %c0_i32 = arith.constant 0 : i32
    %c0_i32_0 = arith.constant 0 : i32
    %c0_i32_1 = arith.constant 0 : i32
    return %arg0, %c0_i32, %c0_i32_0 : i32, i32, i32
  }
  func.func @transform_1(%arg0: i32) -> (i32, i32, i32) {
    %c0_i32 = arith.constant 0 : i32
    %c0_i32_0 = arith.constant 0 : i32
    %c0_i32_1 = arith.constant 0 : i32
    return %arg0, %c0_i32, %c0_i32_0 : i32, i32, i32
  }
  func.func @transform_2(%arg0: i32) -> (i32, i32) {
    %c0_i32 = arith.constant 0 : i32
    %c0_i32_0 = arith.constant 0 : i32
    %c0_i32_1 = arith.constant 0 : i32
    return %c0_i32, %c0_i32_0 : i32, i32
  }
  func.func @transform_3(%arg0: i32) -> (i32, i32) {
    %c0_i32 = arith.constant 0 : i32
    %c0_i32_0 = arith.constant 0 : i32
    %c0_i32_1 = arith.constant 0 : i32
    return %c0_i32, %c0_i32_0 : i32, i32
  }
  func.func @transform_4(%arg0: i32) -> (i32, i32) {
    %c0_i32 = arith.constant 0 : i32
    %c0_i32_0 = arith.constant 0 : i32
    %c0_i32_1 = arith.constant 0 : i32
    return %c0_i32, %c0_i32_0 : i32, i32
  }
  func.func @transform_5(%arg0: i32) -> (i32, i32) {
    %c0_i32 = arith.constant 0 : i32
    %c0_i32_0 = arith.constant 0 : i32
    %c0_i32_1 = arith.constant 0 : i32
    return %c0_i32, %c0_i32_0 : i32, i32
  }
  func.func @transform_6(%arg0: i32) -> (i32, i32) {
    %c0_i32 = arith.constant 0 : i32
    %c0_i32_0 = arith.constant 0 : i32
    %c0_i32_1 = arith.constant 0 : i32
    return %c0_i32, %c0_i32_0 : i32, i32
  }
  func.func @transform_7(%arg0: i32) -> (i32, i32) {
    %c0_i32 = arith.constant 0 : i32
    %c0_i32_0 = arith.constant 0 : i32
    %c0_i32_1 = arith.constant 0 : i32
    return %c0_i32, %c0_i32_0 : i32, i32
  }
  func.func @transform_8(%arg0: i32) -> (i32, i32) {
    %c0_i32 = arith.constant 0 : i32
    %c0_i32_0 = arith.constant 0 : i32
    %c0_i32_1 = arith.constant 0 : i32
    return %c0_i32, %c0_i32_0 : i32, i32
  }
  func.func @transform_9(%arg0: i32) -> (i32, i32, i32) {
    %c0_i32 = arith.constant 0 : i32
    %c0_i32_0 = arith.constant 0 : i32
    %c0_i32_1 = arith.constant 0 : i32
    return %arg0, %c0_i32, %c0_i32_0 : i32, i32, i32
  }
}

</mosaic_0001>

<llo_original>
// kernel: tpu_custom_call.1
$region0: #{tpu_custom_call.1}
  #allocation0 [shape = 'u32[]', space=smem, size = 0x4, offset = 0x4, fixed_abs, tag = 'smem constant byte address 0x4 - core index']
  #allocation1 [shape = 'u32[144,128]{1,0:T(1,128)}', space=vmem, size = 0x12000, scoped, tag = 'internal scratch']
  %s0 = inlined_call_operand.hbm [shape: f32[8,8,16], index: 0, kind: input, shape index: {}]
  %s1 = inlined_call_operand.hbm [shape: bf16[8,8,8], index: 1, kind: input, shape index: {}]
  %s2 = inlined_call_operand.hbm [shape: bf16[16,32], index: 2, kind: input, shape index: {}]
  %s3 = inlined_call_operand.vmem [shape: f32[1,32], index: 3, kind: input, shape index: {}]
  %s4 = inlined_call_operand.hbm [shape: bf16[32,64], index: 4, kind: input, shape index: {}]
  %s5 = inlined_call_operand.vmem [shape: bf16[32,96], index: 5, kind: input, shape index: {}]
  %s6 = inlined_call_operand.hbm [shape: bf16[32,32], index: 6, kind: input, shape index: {}]
  %s7 = inlined_call_operand.vmem [shape: f32[1,64], index: 7, kind: input, shape index: {}]
  %s8 = inlined_call_operand.vmem [shape: f32[1,32], index: 8, kind: input, shape index: {}]
  %s9 = inlined_call_operand.hbm [shape: f32[8,8,32], index: 9, kind: output, shape index: {}]
  %s10 = sld [smem:[#allocation0]]
  $region89: #{tpu_custom_call.1} parent=0
    _
  %s12 = ssub.s32 1, %s10
  %s13 = scalar_select 0, %s12, %s10
  $region1: #{tpu_custom_call.1} parent=0
    #allocation2 [shape = 'u8[32768]{0}', space=vmem, size = 0x8000, scoped, tag = 'input window, operand 0']
    #allocation3 [shape = 's32[2]{0}', space=sflag, size = 0x8, scoped, tag = 'scoped memory for tpu_custom_call.1']
    #allocation4 [shape = 's32[2]{0}', space=sflag, size = 0x8, scoped, tag = 'scoped memory for tpu_custom_call.1']
    #allocation5 [shape = 'u8[16384]{0}', space=vmem, size = 0x4000, scoped, tag = 'input window, operand 1']
    #allocation6 [shape = 's32[2]{0}', space=sflag, size = 0x8, scoped, tag = 'scoped memory for tpu_custom_call.1']
    #allocation7 [shape = 'u8[4096]{0}', space=vmem, size = 0x1000, scoped, tag = 'input window, operand 2, single buffered']
    #allocation8 [shape = 'u8[8192]{0}', space=vmem, size = 0x2000, scoped, tag = 'input window, operand 4, single buffered']
    #allocation9 [shape = 's32[1]{0}', space=sflag, size = 0x4, scoped, tag = 'scoped memory for tpu_custom_call.1']
    #allocation10 [shape = 'u8[8192]{0}', space=vmem, size = 0x2000, scoped, tag = 'input window, operand 6, single buffered']
    #allocation11 [shape = 'u8[32768]{0}', space=vmem, size = 0x8000, scoped, tag = 'output window, operand 0']
    %14 = vsyncpa [#allocation3], 0
    %s15 = scalar_lea.sflag [#allocation3], 1
    %16 = vsyncpa %s15, 0
    %17 = vsyncpa [#allocation6], 0
    %s18 = scalar_lea.sflag [#allocation6], 1
    %19 = vsyncpa %s18, 0
    %20 = vsyncpa [#allocation9], 0
    %21 = vsyncpa [#allocation4], 0
    %s22 = scalar_lea.sflag [#allocation4], 1
    %23 = vsyncpa %s22, 0
    loop: start=0, step=1, limit=4
    $region2: #{tpu_custom_call.1} parent=1 // loop_pre_header
      _
    $region3: #{tpu_custom_call.1} parent=1 // loop_header
      %s25 = sphi 0, %s29
      %p26 = scmp.ge.s32.totalorder %s25, 4
      %s35 = sphi 0, %s37
      %s38 = sphi 0, %s35
      %s39 = sphi 0, %s38
      %s55 = sphi 0, %s39
      %s61 = sphi 0, %s63
      %s64 = sphi 0, %s61
      %s65 = sphi 0, %s64
      %s81 = sphi 0, %s65
      %s85 = sphi 0, %s85
      %s87 = sphi 0, %s85
      %s88 = sphi 0, %s87
      %s102 = sphi 0, %s88
      %s106 = sphi 0, %s106
      %s108 = sphi 0, %s106
      %s109 = sphi 0, %s108
      %s123 = sphi 0, %s109
      %s127 = sphi 0, %s127
      %s129 = sphi 0, %s127
      %s130 = sphi 0, %s129
      %s144 = sphi 0, %s130
      %s148 = sphi 0, %s148
      %s150 = sphi 0, %s148
      %s151 = sphi 0, %s150
      %s165 = sphi 0, %s151
      %s169 = sphi 0, %s169
      %s171 = sphi 0, %s169
      %s172 = sphi 0, %s171
      %s186 = sphi 0, %s172
      %s190 = sphi 0, %s190
      %s192 = sphi 0, %s190
      %s193 = sphi 0, %s192
      %s207 = sphi 0, %s193
      %s211 = sphi 0, %s211
      %s213 = sphi 0, %s211
      %s214 = sphi 0, %s213
      %s228 = sphi 0, %s214
      %s234 = sphi 0, %s236
      %s237 = sphi 0, %s234
      %s238 = sphi 0, %s237
      %s254 = sphi 0, %s238
    $region4: #{tpu_custom_call.1} parent=1 // loop_header_branch
      %28 = sbr.rel (%p26) target = $region8
    $region5: #{tpu_custom_call.1} parent=1 // loop_body
      %s30 = ssub.s32 %s25, 1
      %s31 = ssub.s32 %s25, 2
      %s32 = sadd.s32 %s25, 1
      %s33 = ssub.s32 %s25, %s32
      %p34 = scmp.eq.s32.totalorder %s33, 0
      %s36 = sadd.s32 %s35, 1
      %s37 = scalar_select %p34, %s35, %s36
      %p40 = pneg %p34
      %p41 = scmp.eq.s32.totalorder %s25, 1
      %p42 = por %p40, %p41
      %p43 = scmp.ne.s32.totalorder %s35, %s38
      %p44 = scmp.eq.s32.totalorder %s25, 0
      %p45 = por %p43, %p44
      %p46 = scmp.ne.s32.totalorder %s35, %s38
      %p47 = scmp.eq.s32.totalorder %s30, 1
      %p48 = por %p46, %p47
      %p49 = scmp.ne.s32.totalorder %s38, %s39
      %p50 = scmp.eq.s32.totalorder %s30, 0
      %p51 = por %p49, %p50
      %p52 = scmp.ne.s32.totalorder %s38, %s39
      %p53 = scmp.eq.s32.totalorder %s31, 1
      %p54 = por %p52, %p53
      %p56 = scmp.ne.s32.totalorder %s39, %s55
      %p57 = scmp.eq.s32.totalorder %s31, 0
      %p58 = por %p56, %p57
      %s59 = ssub.s32 %s25, %s32
      %p60 = scmp.eq.s32.totalorder %s59, 0
      %s62 = sadd.s32 %s61, 1
      %s63 = scalar_select %p60, %s61, %s62
      %p66 = pneg %p60
      %p67 = scmp.eq.s32.totalorder %s25, 1
      %p68 = por %p66, %p67
      %p69 = scmp.ne.s32.totalorder %s61, %s64
      %p70 = scmp.eq.s32.totalorder %s25, 0
      %p71 = por %p69, %p70
      %p72 = scmp.ne.s32.totalorder %s61, %s64
      %p73 = scmp.eq.s32.totalorder %s30, 1
      %p74 = por %p72, %p73
      %p75 = scmp.ne.s32.totalorder %s64, %s65
      %p76 = scmp.eq.s32.totalorder %s30, 0
      %p77 = por %p75, %p76
      %p78 = scmp.ne.s32.totalorder %s64, %s65
      %p79 = scmp.eq.s32.totalorder %s31, 1
      %p80 = por %p78, %p79
      %p82 = scmp.ne.s32.totalorder %s65, %s81
      %p83 = scmp.eq.s32.totalorder %s31, 0
      %p84 = por %p82, %p83
      %s86 = sadd.s32 %s85, 1
      %p89 = scmp.eq.s32.totalorder %s25, 1
      %p90 = scmp.ne.s32.totalorder %s85, %s87
      %p91 = scmp.eq.s32.totalorder %s25, 0
      %p92 = por %p90, %p91
      %p93 = scmp.ne.s32.totalorder %s85, %s87
      %p94 = scmp.eq.s32.totalorder %s30, 1
      %p95 = por %p93, %p94
      %p96 = scmp.ne.s32.totalorder %s87, %s88
      %p97 = scmp.eq.s32.totalorder %s30, 0
      %p98 = por %p96, %p97
      %p99 = scmp.ne.s32.totalorder %s87, %s88
      %p100 = scmp.eq.s32.totalorder %s31, 1
      %p101 = por %p99, %p100
      %p103 = scmp.ne.s32.totalorder %s88, %s102
      %p104 = scmp.eq.s32.totalorder %s31, 0
      %p105 = por %p103, %p104
      %s107 = sadd.s32 %s106, 1
      %p110 = scmp.eq.s32.totalorder %s25, 1
      %p111 = scmp.ne.s32.totalorder %s106, %s108
      %p112 = scmp.eq.s32.totalorder %s25, 0
      %p113 = por %p111, %p112
      %p114 = scmp.ne.s32.totalorder %s106, %s108
      %p115 = scmp.eq.s32.totalorder %s30, 1
      %p116 = por %p114, %p115
      %p117 = scmp.ne.s32.totalorder %s108, %s109
      %p118 = scmp.eq.s32.totalorder %s30, 0
      %p119 = por %p117, %p118
      %p120 = scmp.ne.s32.totalorder %s108, %s109
      %p121 = scmp.eq.s32.totalorder %s31, 1
      %p122 = por %p120, %p121
      %p124 = scmp.ne.s32.totalorder %s109, %s123
      %p125 = scmp.eq.s32.totalorder %s31, 0
      %p126 = por %p124, %p125
      %s128 = sadd.s32 %s127, 1
      %p131 = scmp.eq.s32.totalorder %s25, 1
      %p132 = scmp.ne.s32.totalorder %s127, %s129
      %p133 = scmp.eq.s32.totalorder %s25, 0
      %p134 = por %p132, %p133
      %p135 = scmp.ne.s32.totalorder %s127, %s129
      %p136 = scmp.eq.s32.totalorder %s30, 1
      %p137 = por %p135, %p136
      %p138 = scmp.ne.s32.totalorder %s129, %s130
      %p139 = scmp.eq.s32.totalorder %s30, 0
      %p140 = por %p138, %p139
      %p141 = scmp.ne.s32.totalorder %s129, %s130
      %p142 = scmp.eq.s32.totalorder %s31, 1
      %p143 = por %p141, %p142
      %p145 = scmp.ne.s32.totalorder %s130, %s144
      %p146 = scmp.eq.s32.totalorder %s31, 0
      %p147 = por %p145, %p146
      %s149 = sadd.s32 %s148, 1
      %p152 = scmp.eq.s32.totalorder %s25, 1
      %p153 = scmp.ne.s32.totalorder %s148, %s150
      %p154 = scmp.eq.s32.totalorder %s25, 0
      %p155 = por %p153, %p154
      %p156 = scmp.ne.s32.totalorder %s148, %s150
      %p157 = scmp.eq.s32.totalorder %s30, 1
      %p158 = por %p156, %p157
      %p159 = scmp.ne.s32.totalorder %s150, %s151
      %p160 = scmp.eq.s32.totalorder %s30, 0
      %p161 = por %p159, %p160
      %p162 = scmp.ne.s32.totalorder %s150, %s151
      %p163 = scmp.eq.s32.totalorder %s31, 1
      %p164 = por %p162, %p163
      %p166 = scmp.ne.s32.totalorder %s151, %s165
      %p167 = scmp.eq.s32.totalorder %s31, 0
      %p168 = por %p166, %p167
      %s170 = sadd.s32 %s169, 1
      %p173 = scmp.eq.s32.totalorder %s25, 1
      %p174 = scmp.ne.s32.totalorder %s169, %s171
      %p175 = scmp.eq.s32.totalorder %s25, 0
      %p176 = por %p174, %p175
      %p177 = scmp.ne.s32.totalorder %s169, %s171
      %p178 = scmp.eq.s32.totalorder %s30, 1
      %p179 = por %p177, %p178
      %p180 = scmp.ne.s32.totalorder %s171, %s172
      %p181 = scmp.eq.s32.totalorder %s30, 0
      %p182 = por %p180, %p181
      %p183 = scmp.ne.s32.totalorder %s171, %s172
      %p184 = scmp.eq.s32.totalorder %s31, 1
      %p185 = por %p183, %p184
      %p187 = scmp.ne.s32.totalorder %s172, %s186
      %p188 = scmp.eq.s32.totalorder %s31, 0
      %p189 = por %p187, %p188
      %s191 = sadd.s32 %s190, 1
      %p194 = scmp.eq.s32.totalorder %s25, 1
      %p195 = scmp.ne.s32.totalorder %s190, %s192
      %p196 = scmp.eq.s32.totalorder %s25, 0
      %p197 = por %p195, %p196
      %p198 = scmp.ne.s32.totalorder %s190, %s192
      %p199 = scmp.eq.s32.totalorder %s30, 1
      %p200 = por %p198, %p199
      %p201 = scmp.ne.s32.totalorder %s192, %s193
      %p202 = scmp.eq.s32.totalorder %s30, 0
      %p203 = por %p201, %p202
      %p204 = scmp.ne.s32.totalorder %s192, %s193
      %p205 = scmp.eq.s32.totalorder %s31, 1
      %p206 = por %p204, %p205
      %p208 = scmp.ne.s32.totalorder %s193, %s207
      %p209 = scmp.eq.s32.totalorder %s31, 0
      %p210 = por %p208, %p209
      %s212 = sadd.s32 %s211, 1
      %p215 = scmp.eq.s32.totalorder %s25, 1
      %p216 = scmp.ne.s32.totalorder %s211, %s213
      %p217 = scmp.eq.s32.totalorder %s25, 0
      %p218 = por %p216, %p217
      %p219 = scmp.ne.s32.totalorder %s211, %s213
      %p220 = scmp.eq.s32.totalorder %s30, 1
      %p221 = por %p219, %p220
      %p222 = scmp.ne.s32.totalorder %s213, %s214
      %p223 = scmp.eq.s32.totalorder %s30, 0
      %p224 = por %p222, %p223
      %p225 = scmp.ne.s32.totalorder %s213, %s214
      %p226 = scmp.eq.s32.totalorder %s31, 1
      %p227 = por %p225, %p226
      %p229 = scmp.ne.s32.totalorder %s214, %s228
      %p230 = scmp.eq.s32.totalorder %s31, 0
      %p231 = por %p229, %p230
      %s232 = ssub.s32 %s25, %s32
      %p233 = scmp.eq.s32.totalorder %s232, 0
      %s235 = sadd.s32 %s234, 1
      %s236 = scalar_select %p233, %s234, %s235
      %p239 = pneg %p233
      %p240 = scmp.eq.s32.totalorder %s25, 1
      %p241 = por %p239, %p240
      %p242 = scmp.ne.s32.totalorder %s234, %s237
      %p243 = scmp.eq.s32.totalorder %s25, 0
      %p244 = por %p242, %p243
      %p245 = scmp.ne.s32.totalorder %s234, %s237
      %p246 = scmp.eq.s32.totalorder %s30, 1
      %p247 = por %p245, %p246
      %p248 = scmp.ne.s32.totalorder %s237, %s238
      %p249 = scmp.eq.s32.totalorder %s30, 0
      %p250 = por %p248, %p249
      %p251 = scmp.ne.s32.totalorder %s237, %s238
      %p252 = scmp.eq.s32.totalorder %s31, 1
      %p253 = por %p251, %p252
      %p255 = scmp.ne.s32.totalorder %s238, %s254
      %p256 = scmp.eq.s32.totalorder %s31, 0
      %p257 = por %p255, %p256
      %p258 = scmp.le.s32.totalorder 1, %s25
      %p259 = scmp.lt.s32.totalorder %s25, 3
      %p260 = pnand %p258, %p259
      %p261 = pneg %p260
      // Predicated region
      $region9: #{tpu_custom_call.1} parent=5 // pred_check
        _
      $region10: #{tpu_custom_call.1} parent=5 // pred_check_branch
        %263 = sbr.rel (%p260) target = $region12
      $region11: #{tpu_custom_call.1} parent=5 // pred_region
        %s264 = ssub.s32 %s25, 1
        // Predicated region
        $region13: #{tpu_custom_call.1} parent=11 // pred_check
          %p265 = pneg %p98
        $region14: #{tpu_custom_call.1} parent=11 // pred_check_branch
          %267 = sbr.rel (%p265) target = $region16
        $region15: #{tpu_custom_call.1} parent=11 // pred_region
          %s269 = ssub.s32 128, 128
          %270 = vsyncadd [#allocation6], %s269
          %s271 = sshll.u32 [#allocation7], 4
          %s272 = int_to_ptr.vmem [resolvable:$true] %s271
          %277 = dma.hbm_to_vmem [thread:$0]  %s2, 128, %s272, [#allocation6], 64, 64, 4
        $region16: #{tpu_custom_call.1} parent=11 // pred_fallthru
          _
        // Predicated region
        $region17: #{tpu_custom_call.1} parent=11 // pred_check
          %p278 = pneg %p119
        $region18: #{tpu_custom_call.1} parent=11 // pred_check_branch
          %280 = sbr.rel (%p278) target = $region20
        $region19: #{tpu_custom_call.1} parent=11 // pred_region
          _
        $region20: #{tpu_custom_call.1} parent=11 // pred_fallthru
          _
        // Predicated region
        $region21: #{tpu_custom_call.1} parent=11 // pred_check
          %p281 = pneg %p140
        $region22: #{tpu_custom_call.1} parent=11 // pred_check_branch
          %283 = sbr.rel (%p281) target = $region24
        $region23: #{tpu_custom_call.1} parent=11 // pred_region
          %s285 = ssub.s32 256, 256
          %286 = vsyncadd [#allocation9], %s285
          %s287 = sshll.u32 [#allocation8], 4
          %s288 = int_to_ptr.vmem [resolvable:$true] %s287
          %293 = dma.hbm_to_vmem [thread:$0]  %s4, 256, %s288, [#allocation9], 64, 64, 4
        $region24: #{tpu_custom_call.1} parent=11 // pred_fallthru
          _
        // Predicated region
        $region25: #{tpu_custom_call.1} parent=11 // pred_check
          %p294 = pneg %p161
        $region26: #{tpu_custom_call.1} parent=11 // pred_check_branch
          %296 = sbr.rel (%p294) target = $region28
        $region27: #{tpu_custom_call.1} parent=11 // pred_region
          _
        $region28: #{tpu_custom_call.1} parent=11 // pred_fallthru
          _
        // Predicated region
        $region29: #{tpu_custom_call.1} parent=11 // pred_check
          %p297 = pneg %p182
        $region30: #{tpu_custom_call.1} parent=11 // pred_check_branch
          %299 = sbr.rel (%p297) target = $region32
        $region31: #{tpu_custom_call.1} parent=11 // pred_region
          %s301 = ssub.s32 256, 256
          %302 = vsyncadd [#allocation9], %s301
          %s303 = sshll.u32 [#allocation10], 4
          %s304 = int_to_ptr.vmem [resolvable:$true] %s303
          %309 = dma.hbm_to_vmem [thread:$0]  %s6, 256, %s304, [#allocation9], 64, 64, 4
        $region32: #{tpu_custom_call.1} parent=11 // pred_fallthru
          _
        // Predicated region
        $region33: #{tpu_custom_call.1} parent=11 // pred_check
          %p310 = pneg %p203
        $region34: #{tpu_custom_call.1} parent=11 // pred_check_branch
          %312 = sbr.rel (%p310) target = $region36
        $region35: #{tpu_custom_call.1} parent=11 // pred_region
          _
        $region36: #{tpu_custom_call.1} parent=11 // pred_fallthru
          _
        // Predicated region
        $region37: #{tpu_custom_call.1} parent=11 // pred_check
          %p313 = pneg %p224
        $region38: #{tpu_custom_call.1} parent=11 // pred_check_branch
          %315 = sbr.rel (%p313) target = $region40
        $region39: #{tpu_custom_call.1} parent=11 // pred_region
          _
        $region40: #{tpu_custom_call.1} parent=11 // pred_fallthru
          _
      $region12: #{tpu_custom_call.1} parent=5 // pred_fallthru
        _
      %p316 = scmp.lt.s32.totalorder %s25, 2
      // Predicated region
      $region41: #{tpu_custom_call.1} parent=5 // pred_check
        %p317 = pneg %p316
      $region42: #{tpu_custom_call.1} parent=5 // pred_check_branch
        %319 = sbr.rel (%p317) target = $region44
      $region43: #{tpu_custom_call.1} parent=5 // pred_region
        // Predicated region
        $region45: #{tpu_custom_call.1} parent=43 // pred_check
          %p320 = pneg %p45
        $region46: #{tpu_custom_call.1} parent=43 // pred_check_branch
          %322 = sbr.rel (%p320) target = $region48
        $region47: #{tpu_custom_call.1} parent=43 // pred_region
          %s323 = sand.u32 %s35, 1
          %s324 = scalar_lea.sflag [#allocation3], %s323
          %s325 = sand.u32 %s35, 1
          %s326 = smul.addr %s325, 32
          %s327 = scalar_lea.vmem [#allocation2], %s326
          %s328 = smul.u32 4, %s25
          %s330 = ssub.s32 512, 512
          %331 = vsyncadd %s324, %s330
          %s332 = smul.addr %s328, 128
          %s333 = scalar_lea.hbm %s0, %s332
          %s334 = sshll.u32 %s327, 4
          %s335 = int_to_ptr.vmem [resolvable:$true] %s334
          %340 = dma.hbm_to_vmem [thread:$0]  %s333, 512, %s335, %s324, 128, 128, 8
        $region48: #{tpu_custom_call.1} parent=43 // pred_fallthru
          _
        // Predicated region
        $region49: #{tpu_custom_call.1} parent=43 // pred_check
          %p341 = pneg %p71
        $region50: #{tpu_custom_call.1} parent=43 // pred_check_branch
          %343 = sbr.rel (%p341) target = $region52
        $region51: #{tpu_custom_call.1} parent=43 // pred_region
          %s344 = sand.u32 %s25, 1
          %s345 = scalar_lea.sflag [#allocation6], %s344
          %s346 = sand.u32 %s61, 1
          %s347 = smul.addr %s346, 16
          %s348 = scalar_lea.vmem [#allocation5], %s347
          %s349 = smul.u32 4, %s25
          %s351 = ssub.s32 256, 256
          %352 = vsyncadd %s345, %s351
          %s353 = smul.addr %s349, 64
          %s354 = scalar_lea.hbm %s1, %s353
          %s355 = sshll.u32 %s348, 4
          %s356 = int_to_ptr.vmem [resolvable:$true] %s355
          %361 = dma.hbm_to_vmem [thread:$0]  %s354, 256, %s356, %s345, 64, 64, 4
        $region52: #{tpu_custom_call.1} parent=43 // pred_fallthru
          _
      $region44: #{tpu_custom_call.1} parent=5 // pred_fallthru
        _
      %p362 = scmp.le.s32.totalorder 1, %s25
      %p363 = scmp.lt.s32.totalorder %s25, 3
      %p364 = pnand %p362, %p363
      %p365 = pneg %p364
      // Predicated region
      $region53: #{tpu_custom_call.1} parent=5 // pred_check
        _
      $region54: #{tpu_custom_call.1} parent=5 // pred_check_branch
        %367 = sbr.rel (%p364) target = $region56
      $region55: #{tpu_custom_call.1} parent=5 // pred_region
        %s368 = ssub.s32 %s25, 1
        %s369 = sand.u32 %s38, 1
        %s370 = scalar_lea.sflag [#allocation3], %s369
        %s371 = sand.u32 %s38, 1
        %s372 = smul.addr %s371, 32
        %s373 = scalar_lea.vmem [#allocation2], %s372
        // Predicated region
        $region57: #{tpu_custom_call.1} parent=55 // pred_check
          %p374 = pneg %p51
        $region58: #{tpu_custom_call.1} parent=55 // pred_check_branch
          %376 = sbr.rel (%p374) target = $region60
        $region59: #{tpu_custom_call.1} parent=55 // pred_region
          %377 = dma.done %s370, 512
        $region60: #{tpu_custom_call.1} parent=55 // pred_fallthru
          _
        %s378 = sand.u32 %s30, 1
        %s379 = scalar_lea.sflag [#allocation6], %s378
        %s380 = sand.u32 %s64, 1
        %s381 = smul.addr %s380, 16
        %s382 = scalar_lea.vmem [#allocation5], %s381
        // Predicated region
        $region61: #{tpu_custom_call.1} parent=55 // pred_check
          %p383 = pneg %p77
        $region62: #{tpu_custom_call.1} parent=55 // pred_check_branch
          %385 = sbr.rel (%p383) target = $region64
        $region63: #{tpu_custom_call.1} parent=55 // pred_region
          %386 = dma.done %s379, 256
        $region64: #{tpu_custom_call.1} parent=55 // pred_fallthru
          _
        // Predicated region
        $region65: #{tpu_custom_call.1} parent=55 // pred_check
          %p387 = pneg %p98
        $region66: #{tpu_custom_call.1} parent=55 // pred_check_branch
          %389 = sbr.rel (%p387) target = $region68
        $region67: #{tpu_custom_call.1} parent=55 // pred_region
          %390 = dma.done [#allocation6], 128
        $region68: #{tpu_custom_call.1} parent=55 // pred_fallthru
          _
        // Predicated region
        $region69: #{tpu_custom_call.1} parent=55 // pred_check
          %p391 = pneg %p140
        $region70: #{tpu_custom_call.1} parent=55 // pred_check_branch
          %393 = sbr.rel (%p391) target = $region72
        $region71: #{tpu_custom_call.1} parent=55 // pred_region
          %394 = dma.done [#allocation9], 256
        $region72: #{tpu_custom_call.1} parent=55 // pred_fallthru
          _
        // Predicated region
        $region73: #{tpu_custom_call.1} parent=55 // pred_check
          %p395 = pneg %p182
        $region74: #{tpu_custom_call.1} parent=55 // pred_check_branch
          %397 = sbr.rel (%p395) target = $region76
        $region75: #{tpu_custom_call.1} parent=55 // pred_region
          %398 = dma.done [#allocation9], 256
        $region76: #{tpu_custom_call.1} parent=55 // pred_fallthru
          _
        %s399 = sand.u32 %s38, 1
        %s400 = scalar_lea.sflag [#allocation3], %s399
        %s401 = sand.u32 %s38, 1
        %s402 = smul.addr %s401, 32
        %s403 = scalar_lea.vmem [#allocation2], %s402
        %p404 = pneg %p51
        %p405 = pneg %p48
        %s406 = sand.u32 %s30, 1
        %s407 = scalar_lea.sflag [#allocation6], %s406
        %s408 = sand.u32 %s64, 1
        %s409 = smul.addr %s408, 16
        %s410 = scalar_lea.vmem [#allocation5], %s409
        %p411 = pneg %p77
        %p412 = pneg %p74
        %p413 = pneg %p98
        %p414 = pneg %p95
        %p415 = pneg %p119
        %p416 = pneg %p116
        %p417 = pneg %p140
        %p418 = pneg %p137
        %p419 = pneg %p161
        %p420 = pneg %p158
        %p421 = pneg %p182
        %p422 = pneg %p179
        %p423 = pneg %p203
        %p424 = pneg %p200
        %p425 = pneg %p224
        %p426 = pneg %p221
        %p427 = pneg %p250
        %p428 = pneg %p247
        %s429 = sand.u32 %s237, 1
        %s430 = scalar_lea.sflag [#allocation4], %s429
        %s431 = sand.u32 %s237, 1
        %s432 = smul.addr %s431, 32
        %s433 = scalar_lea.vmem [#allocation11], %s432
        %s434 = smul.u32 4, %s30
        %s435 = smul.u32 4, %s30
        %s436 = smul.u32 4, %s30
        %v438 = vld [vmem:[%s382] sm:$0xf]
        %v439 = vld [vmem:[%s382 + $0x4] sm:$0xf]
        %v440 = vld [vmem:[%s382 + $0x8] sm:$0xf]
        %v441 = vld [vmem:[%s382 + $0xc] sm:$0xf]
        %v442 = vld [vmem:[#allocation7] sm:$0xf]
        %v443 = vld [vmem:[#allocation7 + $0x4] sm:$0xf]
        %v444 = vld [vmem:[#allocation8] sm:$0xf]
        %v445 = vld [vmem:[#allocation8 + $0x4] sm:$0xf]
        %v446 = vld [vmem:[#allocation8 + $0x8] sm:$0xf]
        %v447 = vld [vmem:[#allocation8 + $0xc] sm:$0xf]
        %v448 = vld [vmem:[%s5] sm:$0xf]
        %v449 = vld [vmem:[%s5 + $0x4] sm:$0xf]
        %v450 = vld [vmem:[%s5 + $0x8] sm:$0xf]
        %v451 = vld [vmem:[%s5 + $0xc] sm:$0xf]
        %v452 = vld [vmem:[#allocation10] sm:$0xf]
        %v453 = vld [vmem:[#allocation10 + $0x4] sm:$0xf]
        %v454 = vld [vmem:[#allocation10 + $0x8] sm:$0xf]
        %v455 = vld [vmem:[#allocation10 + $0xc] sm:$0xf]
        %v456 = vld [vmem:[%s3] sm:$0x1]
        %v458 = vlaneseq
        %v459 = vshrl.u32 %v458, 7
        %v460 = vsub.s32 0, %v459
        %v461 = vrot.slane %v456, %v460
        %v463 = vld [vmem:[%s7] sm:$0x1]
        %v465 = vlaneseq
        %v466 = vshrl.u32 %v465, 7
        %v467 = vsub.s32 0, %v466
        %v468 = vrot.slane %v463, %v467
        %v470 = vld [vmem:[%s8] sm:$0x1]
        %v472 = vlaneseq
        %v473 = vshrl.u32 %v472, 7
        %v474 = vsub.s32 0, %v473
        %v475 = vrot.slane %v470, %v474
        %v477 = vld [vmem:[%s373] sm:$0xff]
        %v478 = vld [vmem:[%s373 + $0x8] sm:$0xff]
        %v479 = vld [vmem:[%s373 + $0x10] sm:$0xff]
        %v480 = vld [vmem:[%s373 + $0x18] sm:$0xff]
        %v481 = vpack.c.bf16 %v478, %v477
        %v482 = vpack.c.bf16 %v480, %v479
        %v485 = vunpack.c.l.b16 %v442
        %v486 = vunpack.c.l.b16 %v443
        %v487 = vpack.c.b16 %v486, %v485
        %vm489 = vcmask 130048
        %v491 = vsel %vm489, %v481, 0
        %v494 = vsel %vm489, %v482, 0
        %496 = vmatprep.subr.bf16.mxu0 0
        %497 = vmatpush1.bf16.msra.mxu0 %v487
        %498 = vmatprep.subr.bf16.mxu0 0
        %499 = vmatpush1.bf16.msra.mxu0 0
        %500 = vmatprep.subr.bf16.mxu0 0
        %501 = vmatpush1.bf16.msra.mxu0 0
        %502 = vmatprep.subr.bf16.mxu0 0
        %503 = vmatpush1.bf16.msra.mxu0 0
        %504 = vmatprep.subr.bf16.mxu0 0
        %505 = vmatpush1.bf16.msra.mxu0 0
        %506 = vmatprep.subr.bf16.mxu0 0
        %507 = vmatpush1.bf16.msra.mxu0 0
        %508 = vmatprep.subr.bf16.mxu0 0
        %509 = vmatpush1.bf16.msra.mxu0 0
        %510 = vmatprep.subr.bf16.mxu0 0
        %511 = vmatpush1.bf16.msra.mxu0 0
        %512 = vmatprep.subr.bf16.mxu0 0
        %513 = vmatpush1.bf16.msra.mxu0 0
        %514 = vmatprep.subr.bf16.mxu0 0
        %515 = vmatpush1.bf16.msra.mxu0 0
        %516 = vmatprep.subr.bf16.mxu0 0
        %517 = vmatpush1.bf16.msra.mxu0 0
        %518 = vmatprep.subr.bf16.mxu0 0
        %519 = vmatpush1.bf16.msra.mxu0 0
        %520 = vmatprep.subr.bf16.mxu0 0
        %521 = vmatpush1.bf16.msra.mxu0 0
        %522 = vmatprep.subr.bf16.mxu0 0
        %523 = vmatpush1.bf16.msra.mxu0 0
        %524 = vmatprep.subr.bf16.mxu0 0
        %525 = vmatpush1.bf16.msra.mxu0 0
        %526 = vmatprep.subr.bf16.mxu0 0
        %527 = vmatpush1.bf16.msra.mxu0 0
        %528 = vmatprep.mubr.bf16.mxu0 0
        %529 = vmatmul.mubr.bf16.gmra.mrb[0].mxu0 %v491
        %v530 = vpop.f32.mrb[0].mxu0
        %v531 = vadd.f32 %v461, %v530
        %v532 = vpop.f32.mrb[0].mxu0
        %v533 = vpop.f32.mrb[0].mxu0
        %v534 = vadd.f32 %v461, %v533
        %v535 = vpop.f32.mrb[0].mxu0
        %536 = vmatprep.mubr.bf16.mxu0 0
        %537 = vmatmul.mubr.bf16.gmra.mrb[0].mxu0 %v494
        %v538 = vpop.f32.mrb[0].mxu0
        %v539 = vadd.f32 %v461, %v538
        %v540 = vpop.f32.mrb[0].mxu0
        %v541 = vpop.f32.mrb[0].mxu0
        %v542 = vadd.f32 %v461, %v541
        %v543 = vpop.f32.mrb[0].mxu0
        %544 = vdwg.mxu0
        %v545 = vpack.c.bf16 %v534, %v531
        %v546 = vpack.c.bf16 %v542, %v539
        %v549 = vunpack.c.l.b16 %v545
        %v550 = vunpack.c.h.b16 %v545
        %v551 = vunpack.c.l.b16 %v546
        %v552 = vunpack.c.h.b16 %v546
        %v553 = vpack.c.b16 %v549, %v549
        %v554 = vpack.c.b16 %v550, %v550
        %v555 = vpack.c.b16 %v551, %v551
        %v556 = vpack.c.b16 %v552, %v552
        %vm557 = vcmask 64512
        %v559 = vsel %vm557, %v438, 0
        %vm561 = vcmask 1043456
        %v563 = vsel %vm561, %v553, 0
        %565 = vmatprep.subr.bf16.mxu0 0
        %566 = vmatpush1.bf16.msra.mxu0 %v563
        %567 = vmatprep.subr.bf16.mxu0 0
        %568 = vmatpush1.bf16.msra.mxu0 0
        %569 = vmatprep.subr.bf16.mxu0 0
        %570 = vmatpush1.bf16.msra.mxu0 0
        %571 = vmatprep.subr.bf16.mxu0 0
        %572 = vmatpush1.bf16.msra.mxu0 0
        %573 = vmatprep.subr.bf16.mxu0 0
        %574 = vmatpush1.bf16.msra.mxu0 0
        %575 = vmatprep.subr.bf16.mxu0 0
        %576 = vmatpush1.bf16.msra.mxu0 0
        %577 = vmatprep.subr.bf16.mxu0 0
        %578 = vmatpush1.bf16.msra.mxu0 0
        %579 = vmatprep.subr.bf16.mxu0 0
        %580 = vmatpush1.bf16.msra.mxu0 0
        %581 = vmatprep.subr.bf16.mxu0 0
        %582 = vmatpush1.bf16.msra.mxu0 0
        %583 = vmatprep.subr.bf16.mxu0 0
        %584 = vmatpush1.bf16.msra.mxu0 0
        %585 = vmatprep.subr.bf16.mxu0 0
        %586 = vmatpush1.bf16.msra.mxu0 0
        %587 = vmatprep.subr.bf16.mxu0 0
        %588 = vmatpush1.bf16.msra.mxu0 0
        %589 = vmatprep.subr.bf16.mxu0 0
        %590 = vmatpush1.bf16.msra.mxu0 0
        %591 = vmatprep.subr.bf16.mxu0 0
        %592 = vmatpush1.bf16.msra.mxu0 0
        %593 = vmatprep.subr.bf16.mxu0 0
        %594 = vmatpush1.bf16.msra.mxu0 0
        %595 = vmatprep.subr.bf16.mxu0 0
        %596 = vmatpush1.bf16.msra.mxu0 0
        %597 = vmatprep.mubr.bf16.mxu0 0
        %598 = vmatmul.mubr.bf16.gmra.mrb[0].mxu0 %v559
        %v599 = vpop.f32.mrb[0].mxu0
        %v600 = vadd.f32 0.0, %v599
        %v601 = vpop.f32.mrb[0].mxu0
        %v602 = vpop.f32.mrb[0].mxu0
        %v603 = vpop.f32.mrb[0].mxu0
        %604 = vdwg.mxu0
        %v606 = vsel %vm557, %v439, 0
        %v609 = vsel %vm561, %v554, 0
        %611 = vmatprep.subr.bf16.mxu0 0
        %612 = vmatpush1.bf16.msra.mxu0 %v609
        %613 = vmatprep.subr.bf16.mxu0 0
        %614 = vmatpush1.bf16.msra.mxu0 0
        %615 = vmatprep.subr.bf16.mxu0 0
        %616 = vmatpush1.bf16.msra.mxu0 0
        %617 = vmatprep.subr.bf16.mxu0 0
        %618 = vmatpush1.bf16.msra.mxu0 0
        %619 = vmatprep.subr.bf16.mxu0 0
        %620 = vmatpush1.bf16.msra.mxu0 0
        %621 = vmatprep.subr.bf16.mxu0 0
        %622 = vmatpush1.bf16.msra.mxu0 0
        %623 = vmatprep.subr.bf16.mxu0 0
        %624 = vmatpush1.bf16.msra.mxu0 0
        %625 = vmatprep.subr.bf16.mxu0 0
        %626 = vmatpush1.bf16.msra.mxu0 0
        %627 = vmatprep.subr.bf16.mxu0 0
        %628 = vmatpush1.bf16.msra.mxu0 0
        %629 = vmatprep.subr.bf16.mxu0 0
        %630 = vmatpush1.bf16.msra.mxu0 0
        %631 = vmatprep.subr.bf16.mxu0 0
        %632 = vmatpush1.bf16.msra.mxu0 0
        %633 = vmatprep.subr.bf16.mxu0 0
        %634 = vmatpush1.bf16.msra.mxu0 0
        %635 = vmatprep.subr.bf16.mxu0 0
        %636 = vmatpush1.bf16.msra.mxu0 0
        %637 = vmatprep.subr.bf16.mxu0 0
        %638 = vmatpush1.bf16.msra.mxu0 0
        %639 = vmatprep.subr.bf16.mxu0 0
        %640 = vmatpush1.bf16.msra.mxu0 0
        %641 = vmatprep.subr.bf16.mxu0 0
        %642 = vmatpush1.bf16.msra.mxu0 0
        %643 = vmatprep.mubr.bf16.mxu0 0
        %644 = vmatmul.mubr.bf16.gmra.mrb[0].mxu0 %v606
        %v645 = vpop.f32.mrb[0].mxu0
        %v646 = vadd.f32 0.0, %v645
        %v647 = vpop.f32.mrb[0].mxu0
        %v648 = vpop.f32.mrb[0].mxu0
        %v649 = vpop.f32.mrb[0].mxu0
        %650 = vdwg.mxu0
        %v652 = vsel %vm557, %v440, 0
        %v655 = vsel %vm561, %v555, 0
        %657 = vmatprep.subr.bf16.mxu0 0
        %658 = vmatpush1.bf16.msra.mxu0 %v655
        %659 = vmatprep.subr.bf16.mxu0 0
        %660 = vmatpush1.bf16.msra.mxu0 0
        %661 = vmatprep.subr.bf16.mxu0 0
        %662 = vmatpush1.bf16.msra.mxu0 0
        %663 = vmatprep.subr.bf16.mxu0 0
        %664 = vmatpush1.bf16.msra.mxu0 0
        %665 = vmatprep.subr.bf16.mxu0 0
        %666 = vmatpush1.bf16.msra.mxu0 0
        %667 = vmatprep.subr.bf16.mxu0 0
        %668 = vmatpush1.bf16.msra.mxu0 0
        %669 = vmatprep.subr.bf16.mxu0 0
        %670 = vmatpush1.bf16.msra.mxu0 0
        %671 = vmatprep.subr.bf16.mxu0 0
        %672 = vmatpush1.bf16.msra.mxu0 0
        %673 = vmatprep.subr.bf16.mxu0 0
        %674 = vmatpush1.bf16.msra.mxu0 0
        %675 = vmatprep.subr.bf16.mxu0 0
        %676 = vmatpush1.bf16.msra.mxu0 0
        %677 = vmatprep.subr.bf16.mxu0 0
        %678 = vmatpush1.bf16.msra.mxu0 0
        %679 = vmatprep.subr.bf16.mxu0 0
        %680 = vmatpush1.bf16.msra.mxu0 0
        %681 = vmatprep.subr.bf16.mxu0 0
        %682 = vmatpush1.bf16.msra.mxu0 0
        %683 = vmatprep.subr.bf16.mxu0 0
        %684 = vmatpush1.bf16.msra.mxu0 0
        %685 = vmatprep.subr.bf16.mxu0 0
        %686 = vmatpush1.bf16.msra.mxu0 0
        %687 = vmatprep.subr.bf16.mxu0 0
        %688 = vmatpush1.bf16.msra.mxu0 0
        %689 = vmatprep.mubr.bf16.mxu0 0
        %690 = vmatmul.mubr.bf16.gmra.mrb[0].mxu0 %v652
        %v691 = vpop.f32.mrb[0].mxu0
        %v692 = vadd.f32 0.0, %v691
        %v693 = vpop.f32.mrb[0].mxu0
        %v694 = vpop.f32.mrb[0].mxu0
        %v695 = vpop.f32.mrb[0].mxu0
        %696 = vdwg.mxu0
        %v698 = vsel %vm557, %v441, 0
        %v701 = vsel %vm561, %v556, 0
        %703 = vmatprep.subr.bf16.mxu0 0
        %704 = vmatpush1.bf16.msra.mxu0 %v701
        %705 = vmatprep.subr.bf16.mxu0 0
        %706 = vmatpush1.bf16.msra.mxu0 0
        %707 = vmatprep.subr.bf16.mxu0 0
        %708 = vmatpush1.bf16.msra.mxu0 0
        %709 = vmatprep.subr.bf16.mxu0 0
        %710 = vmatpush1.bf16.msra.mxu0 0
        %711 = vmatprep.subr.bf16.mxu0 0
        %712 = vmatpush1.bf16.msra.mxu0 0
        %713 = vmatprep.subr.bf16.mxu0 0
        %714 = vmatpush1.bf16.msra.mxu0 0
        %715 = vmatprep.subr.bf16.mxu0 0
        %716 = vmatpush1.bf16.msra.mxu0 0
        %717 = vmatprep.subr.bf16.mxu0 0
        %718 = vmatpush1.bf16.msra.mxu0 0
        %719 = vmatprep.subr.bf16.mxu0 0
        %720 = vmatpush1.bf16.msra.mxu0 0
        %721 = vmatprep.subr.bf16.mxu0 0
        %722 = vmatpush1.bf16.msra.mxu0 0
        %723 = vmatprep.subr.bf16.mxu0 0
        %724 = vmatpush1.bf16.msra.mxu0 0
        %725 = vmatprep.subr.bf16.mxu0 0
        %726 = vmatpush1.bf16.msra.mxu0 0
        %727 = vmatprep.subr.bf16.mxu0 0
        %728 = vmatpush1.bf16.msra.mxu0 0
        %729 = vmatprep.subr.bf16.mxu0 0
        %730 = vmatpush1.bf16.msra.mxu0 0
        %731 = vmatprep.subr.bf16.mxu0 0
        %732 = vmatpush1.bf16.msra.mxu0 0
        %733 = vmatprep.subr.bf16.mxu0 0
        %734 = vmatpush1.bf16.msra.mxu0 0
        %735 = vmatprep.mubr.bf16.mxu0 0
        %736 = vmatmul.mubr.bf16.gmra.mrb[0].mxu0 %v698
        %v737 = vpop.f32.mrb[0].mxu0
        %v738 = vadd.f32 0.0, %v737
        %v739 = vpop.f32.mrb[0].mxu0
        %v740 = vpop.f32.mrb[0].mxu0
        %v741 = vpop.f32.mrb[0].mxu0
        %742 = vdwg.mxu0
        %v743 = vpack.c.bf16 %v646, %v600
        %v744 = vpack.c.bf16 %v738, %v692
        %v749 = vunpack.c.l.b16 %v448
        %v750 = vunpack.c.l.b16 %v449
        %v751 = vunpack.c.l.b16 %v450
        %v752 = vunpack.c.l.b16 %v451
        %v753 = vpack.c.b16 %v750, %v749
        %v754 = vpack.c.b16 %v752, %v751
        %vm757 = vcmask 261120
        %v759 = vsel %vm757, %v743, 0
        %v762 = vsel %vm757, %v744, 0
        %764 = vmatprep.subr.bf16.mxu0 0
        %765 = vmatpush1.bf16.msra.mxu0 %v753
        %766 = vmatprep.subr.bf16.mxu0 0
        %767 = vmatpush1.bf16.msra.mxu0 %v754
        %768 = vmatprep.subr.bf16.mxu0 0
        %769 = vmatpush1.bf16.msra.mxu0 0
        %770 = vmatprep.subr.bf16.mxu0 0
        %771 = vmatpush1.bf16.msra.mxu0 0
        %772 = vmatprep.subr.bf16.mxu0 0
        %773 = vmatpush1.bf16.msra.mxu0 0
        %774 = vmatprep.subr.bf16.mxu0 0
        %775 = vmatpush1.bf16.msra.mxu0 0
        %776 = vmatprep.subr.bf16.mxu0 0
        %777 = vmatpush1.bf16.msra.mxu0 0
        %778 = vmatprep.subr.bf16.mxu0 0
        %779 = vmatpush1.bf16.msra.mxu0 0
        %780 = vmatprep.subr.bf16.mxu0 0
        %781 = vmatpush1.bf16.msra.mxu0 0
        %782 = vmatprep.subr.bf16.mxu0 0
        %783 = vmatpush1.bf16.msra.mxu0 0
        %784 = vmatprep.subr.bf16.mxu0 0
        %785 = vmatpush1.bf16.msra.mxu0 0
        %786 = vmatprep.subr.bf16.mxu0 0
        %787 = vmatpush1.bf16.msra.mxu0 0
        %788 = vmatprep.subr.bf16.mxu0 0
        %789 = vmatpush1.bf16.msra.mxu0 0
        %790 = vmatprep.subr.bf16.mxu0 0
        %791 = vmatpush1.bf16.msra.mxu0 0
        %792 = vmatprep.subr.bf16.mxu0 0
        %793 = vmatpush1.bf16.msra.mxu0 0
        %794 = vmatprep.subr.bf16.mxu0 0
        %795 = vmatpush1.bf16.msra.mxu0 0
        %796 = vmatprep.mubr.bf16.mxu0 0
        %797 = vmatmul.mubr.bf16.gmra.mrb[0].mxu0 %v759
        %v798 = vpop.f32.mrb[0].mxu0
        %v799 = vadd.f32 0.0, %v798
        %v800 = vpop.f32.mrb[0].mxu0
        %v801 = vpop.f32.mrb[0].mxu0
        %v802 = vadd.f32 0.0, %v801
        %v803 = vpop.f32.mrb[0].mxu0
        %804 = vmatprep.mubr.bf16.mxu0 0
        %805 = vmatmul.mubr.bf16.gmra.mrb[0].mxu0 %v762
        %v806 = vpop.f32.mrb[0].mxu0
        %v807 = vadd.f32 0.0, %v806
        %v808 = vpop.f32.mrb[0].mxu0
        %v809 = vpop.f32.mrb[0].mxu0
        %v810 = vadd.f32 0.0, %v809
        %v811 = vpop.f32.mrb[0].mxu0
        %812 = vdwg.mxu0
        %v817 = vunpack.c.l.b16 %v444
        %v818 = vunpack.c.l.b16 %v445
        %v819 = vunpack.c.l.b16 %v446
        %v820 = vunpack.c.l.b16 %v447
        %v821 = vpack.c.b16 %v818, %v817
        %v822 = vpack.c.b16 %v820, %v819
        %v826 = vsel %vm757, %v545, 0
        %v829 = vsel %vm757, %v546, 0
        %831 = vmatprep.subr.bf16.mxu0 0
        %832 = vmatpush1.bf16.msra.mxu0 %v821
        %833 = vmatprep.subr.bf16.mxu0 0
        %834 = vmatpush1.bf16.msra.mxu0 %v822
        %835 = vmatprep.subr.bf16.mxu0 0
        %836 = vmatpush1.bf16.msra.mxu0 0
        %837 = vmatprep.subr.bf16.mxu0 0
        %838 = vmatpush1.bf16.msra.mxu0 0
        %839 = vmatprep.subr.bf16.mxu0 0
        %840 = vmatpush1.bf16.msra.mxu0 0
        %841 = vmatprep.subr.bf16.mxu0 0
        %842 = vmatpush1.bf16.msra.mxu0 0
        %843 = vmatprep.subr.bf16.mxu0 0
        %844 = vmatpush1.bf16.msra.mxu0 0
        %845 = vmatprep.subr.bf16.mxu0 0
        %846 = vmatpush1.bf16.msra.mxu0 0
        %847 = vmatprep.subr.bf16.mxu0 0
        %848 = vmatpush1.bf16.msra.mxu0 0
        %849 = vmatprep.subr.bf16.mxu0 0
        %850 = vmatpush1.bf16.msra.mxu0 0
        %851 = vmatprep.subr.bf16.mxu0 0
        %852 = vmatpush1.bf16.msra.mxu0 0
        %853 = vmatprep.subr.bf16.mxu0 0
        %854 = vmatpush1.bf16.msra.mxu0 0
        %855 = vmatprep.subr.bf16.mxu0 0
        %856 = vmatpush1.bf16.msra.mxu0 0
        %857 = vmatprep.subr.bf16.mxu0 0
        %858 = vmatpush1.bf16.msra.mxu0 0
        %859 = vmatprep.subr.bf16.mxu0 0
        %860 = vmatpush1.bf16.msra.mxu0 0
        %861 = vmatprep.subr.bf16.mxu0 0
        %862 = vmatpush1.bf16.msra.mxu0 0
        %863 = vmatprep.mubr.bf16.mxu0 0
        %864 = vmatmul.mubr.bf16.gmra.mrb[0].mxu0 %v826
        %v865 = vpop.f32.mrb[0].mxu0
        %v866 = vadd.f32 %v799, %v865
        %v867 = vpop.f32.mrb[0].mxu0
        %v868 = vpop.f32.mrb[0].mxu0
        %v869 = vadd.f32 %v802, %v868
        %v870 = vpop.f32.mrb[0].mxu0
        %871 = vmatprep.mubr.bf16.mxu0 0
        %872 = vmatmul.mubr.bf16.gmra.mrb[0].mxu0 %v829
        %v873 = vpop.f32.mrb[0].mxu0
        %v874 = vadd.f32 %v807, %v873
        %v875 = vpop.f32.mrb[0].mxu0
        %v876 = vpop.f32.mrb[0].mxu0
        %v877 = vadd.f32 %v810, %v876
        %v878 = vpop.f32.mrb[0].mxu0
        %879 = vdwg.mxu0
        %v880 = vadd.f32 %v866, %v468
        %v881 = vadd.f32 %v869, %v468
        %v882 = vadd.f32 %v874, %v468
        %v883 = vadd.f32 %v877, %v468
        %v884 = vxor.u32 %v880, 2147483648
        %v885 = vxor.u32 %v881, 2147483648
        %v886 = vxor.u32 %v882, 2147483648
        %v887 = vxor.u32 %v883, 2147483648
        %v888 = vmul.f32 %v884, 1.442695
        %v889 = vpow.pop %v888
        %v890 = vmul.f32 %v885, 1.442695
        %v891 = vpow.pop %v890
        %v892 = vmul.f32 %v886, 1.442695
        %v893 = vpow.pop %v892
        %v894 = vmul.f32 %v887, 1.442695
        %v895 = vpow.pop %v894
        %v896 = vadd.f32 %v889, 1.0
        %v897 = vadd.f32 %v891, 1.0
        %v898 = vadd.f32 %v893, 1.0
        %v899 = vadd.f32 %v895, 1.0
        %v900 = vrcp.pop %v896
        %v901 = vmul.f32 1.0, %v900
        %v902 = vrcp.pop %v897
        %v903 = vmul.f32 1.0, %v902
        %v904 = vrcp.pop %v898
        %v905 = vmul.f32 1.0, %v904
        %v906 = vrcp.pop %v899
        %v907 = vmul.f32 1.0, %v906
        %912 = vrot.lane.b32.xlu0 %v531, 32
        %v913 = vpop.permute.xlu0 %912
        %914 = vrot.lane.b32.xlu0 %v534, 32
        %v915 = vpop.permute.xlu0 %914
        %916 = vrot.lane.b32.xlu0 %v539, 32
        %v917 = vpop.permute.xlu0 %916
        %918 = vrot.lane.b32.xlu0 %v542, 32
        %v919 = vpop.permute.xlu0 %918
        %v924 = vmul.f32 %v901, %v913
        %v925 = vmul.f32 %v903, %v915
        %v926 = vmul.f32 %v905, %v917
        %v927 = vmul.f32 %v907, %v919
        %v928 = vpack.c.bf16 %v925, %v924
        %v929 = vpack.c.bf16 %v927, %v926
        %932 = vrot.lane.b32.xlu0 %v928, 96
        %v933 = vpop.permute.xlu0 %932
        %934 = vrot.lane.b32.xlu0 %v929, 96
        %v935 = vpop.permute.xlu0 %934
        %v940 = vunpack.c.l.b16 %v452
        %v941 = vunpack.c.l.b16 %v453
        %v942 = vunpack.c.l.b16 %v454
        %v943 = vunpack.c.l.b16 %v455
        %v944 = vpack.c.b16 %v941, %v940
        %v945 = vpack.c.b16 %v943, %v942
        %952 = vrot.lane.b32.xlu0 %v799, 64
        %v953 = vpop.permute.xlu0 %952
        %954 = vrot.lane.b32.xlu0 %v802, 64
        %v955 = vpop.permute.xlu0 %954
        %956 = vrot.lane.b32.xlu0 %v807, 64
        %v957 = vpop.permute.xlu0 %956
        %958 = vrot.lane.b32.xlu0 %v810, 64
        %v959 = vpop.permute.xlu0 %958
        %v965 = vsel %vm757, %v933, 0
        %v968 = vsel %vm757, %v935, 0
        %970 = vmatprep.subr.bf16.mxu0 0
        %971 = vmatpush1.bf16.msra.mxu0 %v944
        %972 = vmatprep.subr.bf16.mxu0 0
        %973 = vmatpush1.bf16.msra.mxu0 %v945
        %974 = vmatprep.subr.bf16.mxu0 0
        %975 = vmatpush1.bf16.msra.mxu0 0
        %976 = vmatprep.subr.bf16.mxu0 0
        %977 = vmatpush1.bf16.msra.mxu0 0
        %978 = vmatprep.subr.bf16.mxu0 0
        %979 = vmatpush1.bf16.msra.mxu0 0
        %980 = vmatprep.subr.bf16.mxu0 0
        %981 = vmatpush1.bf16.msra.mxu0 0
        %982 = vmatprep.subr.bf16.mxu0 0
        %983 = vmatpush1.bf16.msra.mxu0 0
        %984 = vmatprep.subr.bf16.mxu0 0
        %985 = vmatpush1.bf16.msra.mxu0 0
        %986 = vmatprep.subr.bf16.mxu0 0
        %987 = vmatpush1.bf16.msra.mxu0 0
        %988 = vmatprep.subr.bf16.mxu0 0
        %989 = vmatpush1.bf16.msra.mxu0 0
        %990 = vmatprep.subr.bf16.mxu0 0
        %991 = vmatpush1.bf16.msra.mxu0 0
        %992 = vmatprep.subr.bf16.mxu0 0
        %993 = vmatpush1.bf16.msra.mxu0 0
        %994 = vmatprep.subr.bf16.mxu0 0
        %995 = vmatpush1.bf16.msra.mxu0 0
        %996 = vmatprep.subr.bf16.mxu0 0
        %997 = vmatpush1.bf16.msra.mxu0 0
        %998 = vmatprep.subr.bf16.mxu0 0
        %999 = vmatpush1.bf16.msra.mxu0 0
        %1000 = vmatprep.subr.bf16.mxu0 0
        %1001 = vmatpush1.bf16.msra.mxu0 0
        %1002 = vmatprep.mubr.bf16.mxu0 0
        %1003 = vmatmul.mubr.bf16.gmra.mrb[0].mxu0 %v965
        %v1004 = vpop.f32.mrb[0].mxu0
        %v1005 = vadd.f32 %v953, %v1004
        %v1006 = vpop.f32.mrb[0].mxu0
        %v1007 = vpop.f32.mrb[0].mxu0
        %v1008 = vadd.f32 %v955, %v1007
        %v1009 = vpop.f32.mrb[0].mxu0
        %1010 = vmatprep.mubr.bf16.mxu0 0
        %1011 = vmatmul.mubr.bf16.gmra.mrb[0].mxu0 %v968
        %v1012 = vpop.f32.mrb[0].mxu0
        %v1013 = vadd.f32 %v957, %v1012
        %v1014 = vpop.f32.mrb[0].mxu0
        %v1015 = vpop.f32.mrb[0].mxu0
        %v1016 = vadd.f32 %v959, %v1015
        %v1017 = vpop.f32.mrb[0].mxu0
        %1018 = vdwg.mxu0
        %v1019 = vadd.f32 %v1005, %v475
        %v1020 = vadd.f32 %v1008, %v475
        %v1021 = vadd.f32 %v1013, %v475
        %v1022 = vadd.f32 %v1016, %v475
        %v1023 = vtanh.pop %v1019
        %v1024 = vtanh.pop %v1020
        %v1025 = vtanh.pop %v1021
        %v1026 = vtanh.pop %v1022
        %v1027 = vmul.f32 %v901, %v531
        %v1028 = vmul.f32 %v903, %v534
        %v1029 = vmul.f32 %v905, %v539
        %v1030 = vmul.f32 %v907, %v542
        %v1031 = vsub.f32 1.0, %v901
        %v1032 = vsub.f32 1.0, %v903
        %v1033 = vsub.f32 1.0, %v905
        %v1034 = vsub.f32 1.0, %v907
        %v1035 = vmul.f32 %v1031, %v1023
        %v1036 = vmul.f32 %v1032, %v1024
        %v1037 = vmul.f32 %v1033, %v1025
        %v1038 = vmul.f32 %v1034, %v1026
        %v1039 = vadd.f32 %v1027, %v1035
        %v1040 = vadd.f32 %v1028, %v1036
        %v1041 = vadd.f32 %v1029, %v1037
        %v1042 = vadd.f32 %v1030, %v1038
        %v1043 = vpack.c.bf16 %v1040, %v1039
        %v1044 = vpack.c.bf16 %v1042, %v1041
        %v1047 = vunpack.c.l.b16 %v1043
        %v1048 = vunpack.c.h.b16 %v1043
        %v1049 = vunpack.c.l.b16 %v1044
        %v1050 = vunpack.c.h.b16 %v1044
        %v1051 = vpack.c.b16 %v1047, %v1047
        %v1052 = vpack.c.b16 %v1048, %v1048
        %v1053 = vpack.c.b16 %v1049, %v1049
        %v1054 = vpack.c.b16 %v1050, %v1050
        %v1056 = vsel %vm561, %v1051, 0
        %1058 = vmatprep.subr.bf16.mxu0 0
        %1059 = vmatpush1.bf16.msra.mxu0 %v1056
        %1060 = vmatprep.subr.bf16.mxu0 0
        %1061 = vmatpush1.bf16.msra.mxu0 0
        %1062 = vmatprep.subr.bf16.mxu0 0
        %1063 = vmatpush1.bf16.msra.mxu0 0
        %1064 = vmatprep.subr.bf16.mxu0 0
        %1065 = vmatpush1.bf16.msra.mxu0 0
        %1066 = vmatprep.subr.bf16.mxu0 0
        %1067 = vmatpush1.bf16.msra.mxu0 0
        %1068 = vmatprep.subr.bf16.mxu0 0
        %1069 = vmatpush1.bf16.msra.mxu0 0
        %1070 = vmatprep.subr.bf16.mxu0 0
        %1071 = vmatpush1.bf16.msra.mxu0 0
        %1072 = vmatprep.subr.bf16.mxu0 0
        %1073 = vmatpush1.bf16.msra.mxu0 0
        %1074 = vmatprep.subr.bf16.mxu0 0
        %1075 = vmatpush1.bf16.msra.mxu0 0
        %1076 = vmatprep.subr.bf16.mxu0 0
        %1077 = vmatpush1.bf16.msra.mxu0 0
        %1078 = vmatprep.subr.bf16.mxu0 0
        %1079 = vmatpush1.bf16.msra.mxu0 0
        %1080 = vmatprep.subr.bf16.mxu0 0
        %1081 = vmatpush1.bf16.msra.mxu0 0
        %1082 = vmatprep.subr.bf16.mxu0 0
        %1083 = vmatpush1.bf16.msra.mxu0 0
        %1084 = vmatprep.subr.bf16.mxu0 0
        %1085 = vmatpush1.bf16.msra.mxu0 0
        %1086 = vmatprep.subr.bf16.mxu0 0
        %1087 = vmatpush1.bf16.msra.mxu0 0
        %1088 = vmatprep.subr.bf16.mxu0 0
        %1089 = vmatpush1.bf16.msra.mxu0 0
        %1090 = vmatprep.mubr.bf16.mxu0 0
        %1091 = vmatmul.mubr.bf16.gmra.mrb[0].mxu0 %v559
        %v1092 = vpop.f32.mrb[0].mxu0
        %v1093 = vadd.f32 0.0, %v1092
        %v1094 = vpop.f32.mrb[0].mxu0
        %v1095 = vpop.f32.mrb[0].mxu0
        %v1096 = vpop.f32.mrb[0].mxu0
        %1097 = vdwg.mxu0
        %v1099 = vsel %vm561, %v1052, 0
        %1101 = vmatprep.subr.bf16.mxu0 0
        %1102 = vmatpush1.bf16.msra.mxu0 %v1099
        %1103 = vmatprep.subr.bf16.mxu0 0
        %1104 = vmatpush1.bf16.msra.mxu0 0
        %1105 = vmatprep.subr.bf16.mxu0 0
        %1106 = vmatpush1.bf16.msra.mxu0 0
        %1107 = vmatprep.subr.bf16.mxu0 0
        %1108 = vmatpush1.bf16.msra.mxu0 0
        %1109 = vmatprep.subr.bf16.mxu0 0
        %1110 = vmatpush1.bf16.msra.mxu0 0
        %1111 = vmatprep.subr.bf16.mxu0 0
        %1112 = vmatpush1.bf16.msra.mxu0 0
        %1113 = vmatprep.subr.bf16.mxu0 0
        %1114 = vmatpush1.bf16.msra.mxu0 0
        %1115 = vmatprep.subr.bf16.mxu0 0
        %1116 = vmatpush1.bf16.msra.mxu0 0
        %1117 = vmatprep.subr.bf16.mxu0 0
        %1118 = vmatpush1.bf16.msra.mxu0 0
        %1119 = vmatprep.subr.bf16.mxu0 0
        %1120 = vmatpush1.bf16.msra.mxu0 0
        %1121 = vmatprep.subr.bf16.mxu0 0
        %1122 = vmatpush1.bf16.msra.mxu0 0
        %1123 = vmatprep.subr.bf16.mxu0 0
        %1124 = vmatpush1.bf16.msra.mxu0 0
        %1125 = vmatprep.subr.bf16.mxu0 0
        %1126 = vmatpush1.bf16.msra.mxu0 0
        %1127 = vmatprep.subr.bf16.mxu0 0
        %1128 = vmatpush1.bf16.msra.mxu0 0
        %1129 = vmatprep.subr.bf16.mxu0 0
        %1130 = vmatpush1.bf16.msra.mxu0 0
        %1131 = vmatprep.subr.bf16.mxu0 0
        %1132 = vmatpush1.bf16.msra.mxu0 0
        %1133 = vmatprep.mubr.bf16.mxu0 0
        %1134 = vmatmul.mubr.bf16.gmra.mrb[0].mxu0 %v606
        %v1135 = vpop.f32.mrb[0].mxu0
        %v1136 = vadd.f32 0.0, %v1135
        %v1137 = vpop.f32.mrb[0].mxu0
        %v1138 = vpop.f32.mrb[0].mxu0
        %v1139 = vpop.f32.mrb[0].mxu0
        %1140 = vdwg.mxu0
        %v1142 = vsel %vm561, %v1053, 0
        %1144 = vmatprep.subr.bf16.mxu0 0
        %1145 = vmatpush1.bf16.msra.mxu0 %v1142
        %1146 = vmatprep.subr.bf16.mxu0 0
        %1147 = vmatpush1.bf16.msra.mxu0 0
        %1148 = vmatprep.subr.bf16.mxu0 0
        %1149 = vmatpush1.bf16.msra.mxu0 0
        %1150 = vmatprep.subr.bf16.mxu0 0
        %1151 = vmatpush1.bf16.msra.mxu0 0
        %1152 = vmatprep.subr.bf16.mxu0 0
        %1153 = vmatpush1.bf16.msra.mxu0 0
        %1154 = vmatprep.subr.bf16.mxu0 0
        %1155 = vmatpush1.bf16.msra.mxu0 0
        %1156 = vmatprep.subr.bf16.mxu0 0
        %1157 = vmatpush1.bf16.msra.mxu0 0
        %1158 = vmatprep.subr.bf16.mxu0 0
        %1159 = vmatpush1.bf16.msra.mxu0 0
        %1160 = vmatprep.subr.bf16.mxu0 0
        %1161 = vmatpush1.bf16.msra.mxu0 0
        %1162 = vmatprep.subr.bf16.mxu0 0
        %1163 = vmatpush1.bf16.msra.mxu0 0
        %1164 = vmatprep.subr.bf16.mxu0 0
        %1165 = vmatpush1.bf16.msra.mxu0 0
        %1166 = vmatprep.subr.bf16.mxu0 0
        %1167 = vmatpush1.bf16.msra.mxu0 0
        %1168 = vmatprep.subr.bf16.mxu0 0
        %1169 = vmatpush1.bf16.msra.mxu0 0
        %1170 = vmatprep.subr.bf16.mxu0 0
        %1171 = vmatpush1.bf16.msra.mxu0 0
        %1172 = vmatprep.subr.bf16.mxu0 0
        %1173 = vmatpush1.bf16.msra.mxu0 0
        %1174 = vmatprep.subr.bf16.mxu0 0
        %1175 = vmatpush1.bf16.msra.mxu0 0
        %1176 = vmatprep.mubr.bf16.mxu0 0
        %1177 = vmatmul.mubr.bf16.gmra.mrb[0].mxu0 %v652
        %v1178 = vpop.f32.mrb[0].mxu0
        %v1179 = vadd.f32 0.0, %v1178
        %v1180 = vpop.f32.mrb[0].mxu0
        %v1181 = vpop.f32.mrb[0].mxu0
        %v1182 = vpop.f32.mrb[0].mxu0
        %1183 = vdwg.mxu0
        %v1185 = vsel %vm561, %v1054, 0
        %1187 = vmatprep.subr.bf16.mxu0 0
        %1188 = vmatpush1.bf16.msra.mxu0 %v1185
        %1189 = vmatprep.subr.bf16.mxu0 0
        %1190 = vmatpush1.bf16.msra.mxu0 0
        %1191 = vmatprep.subr.bf16.mxu0 0
        %1192 = vmatpush1.bf16.msra.mxu0 0
        %1193 = vmatprep.subr.bf16.mxu0 0
        %1194 = vmatpush1.bf16.msra.mxu0 0
        %1195 = vmatprep.subr.bf16.mxu0 0
        %1196 = vmatpush1.bf16.msra.mxu0 0
        %1197 = vmatprep.subr.bf16.mxu0 0
        %1198 = vmatpush1.bf16.msra.mxu0 0
        %1199 = vmatprep.subr.bf16.mxu0 0
        %1200 = vmatpush1.bf16.msra.mxu0 0
        %1201 = vmatprep.subr.bf16.mxu0 0
        %1202 = vmatpush1.bf16.msra.mxu0 0
        %1203 = vmatprep.subr.bf16.mxu0 0
        %1204 = vmatpush1.bf16.msra.mxu0 0
        %1205 = vmatprep.subr.bf16.mxu0 0
        %1206 = vmatpush1.bf16.msra.mxu0 0
        %1207 = vmatprep.subr.bf16.mxu0 0
        %1208 = vmatpush1.bf16.msra.mxu0 0
        %1209 = vmatprep.subr.bf16.mxu0 0
        %1210 = vmatpush1.bf16.msra.mxu0 0
        %1211 = vmatprep.subr.bf16.mxu0 0
        %1212 = vmatpush1.bf16.msra.mxu0 0
        %1213 = vmatprep.subr.bf16.mxu0 0
        %1214 = vmatpush1.bf16.msra.mxu0 0
        %1215 = vmatprep.subr.bf16.mxu0 0
        %1216 = vmatpush1.bf16.msra.mxu0 0
        %1217 = vmatprep.subr.bf16.mxu0 0
        %1218 = vmatpush1.bf16.msra.mxu0 0
        %1219 = vmatprep.mubr.bf16.mxu0 0
        %1220 = vmatmul.mubr.bf16.gmra.mrb[0].mxu0 %v698
        %v1221 = vpop.f32.mrb[0].mxu0
        %v1222 = vadd.f32 0.0, %v1221
        %v1223 = vpop.f32.mrb[0].mxu0
        %v1224 = vpop.f32.mrb[0].mxu0
        %v1225 = vpop.f32.mrb[0].mxu0
        %1226 = vdwg.mxu0
        %v1227 = vpack.c.bf16 %v1136, %v1093
        %v1228 = vpack.c.bf16 %v1222, %v1179
        %v1230 = vsel %vm757, %v1227, 0
        %v1233 = vsel %vm757, %v1228, 0
        %1235 = vmatprep.subr.bf16.mxu0 0
        %1236 = vmatpush1.bf16.msra.mxu0 %v753
        %1237 = vmatprep.subr.bf16.mxu0 0
        %1238 = vmatpush1.bf16.msra.mxu0 %v754
        %1239 = vmatprep.subr.bf16.mxu0 0
        %1240 = vmatpush1.bf16.msra.mxu0 0
        %1241 = vmatprep.subr.bf16.mxu0 0
        %1242 = vmatpush1.bf16.msra.mxu0 0
        %1243 = vmatprep.subr.bf16.mxu0 0
        %1244 = vmatpush1.bf16.msra.mxu0 0
        %1245 = vmatprep.subr.bf16.mxu0 0
        %1246 = vmatpush1.bf16.msra.mxu0 0
        %1247 = vmatprep.subr.bf16.mxu0 0
        %1248 = vmatpush1.bf16.msra.mxu0 0
        %1249 = vmatprep.subr.bf16.mxu0 0
        %1250 = vmatpush1.bf16.msra.mxu0 0
        %1251 = vmatprep.subr.bf16.mxu0 0
        %1252 = vmatpush1.bf16.msra.mxu0 0
        %1253 = vmatprep.subr.bf16.mxu0 0
        %1254 = vmatpush1.bf16.msra.mxu0 0
        %1255 = vmatprep.subr.bf16.mxu0 0
        %1256 = vmatpush1.bf16.msra.mxu0 0
        %1257 = vmatprep.subr.bf16.mxu0 0
        %1258 = vmatpush1.bf16.msra.mxu0 0
        %1259 = vmatprep.subr.bf16.mxu0 0
        %1260 = vmatpush1.bf16.msra.mxu0 0
        %1261 = vmatprep.subr.bf16.mxu0 0
        %1262 = vmatpush1.bf16.msra.mxu0 0
        %1263 = vmatprep.subr.bf16.mxu0 0
        %1264 = vmatpush1.bf16.msra.mxu0 0
        %1265 = vmatprep.subr.bf16.mxu0 0
        %1266 = vmatpush1.bf16.msra.mxu0 0
        %1267 = vmatprep.mubr.bf16.mxu0 0
        %1268 = vmatmul.mubr.bf16.gmra.mrb[0].mxu0 %v1230
        %v1269 = vpop.f32.mrb[0].mxu0
        %v1270 = vadd.f32 0.0, %v1269
        %v1271 = vpop.f32.mrb[0].mxu0
        %v1272 = vpop.f32.mrb[0].mxu0
        %v1273 = vadd.f32 0.0, %v1272
        %v1274 = vpop.f32.mrb[0].mxu0
        %1275 = vmatprep.mubr.bf16.mxu0 0
        %1276 = vmatmul.mubr.bf16.gmra.mrb[0].mxu0 %v1233
        %v1277 = vpop.f32.mrb[0].mxu0
        %v1278 = vadd.f32 0.0, %v1277
        %v1279 = vpop.f32.mrb[0].mxu0
        %v1280 = vpop.f32.mrb[0].mxu0
        %v1281 = vadd.f32 0.0, %v1280
        %v1282 = vpop.f32.mrb[0].mxu0
        %1283 = vdwg.mxu0
        %v1285 = vsel %vm757, %v1043, 0
        %v1288 = vsel %vm757, %v1044, 0
        %1290 = vmatprep.subr.bf16.mxu0 0
        %1291 = vmatpush1.bf16.msra.mxu0 %v821
        %1292 = vmatprep.subr.bf16.mxu0 0
        %1293 = vmatpush1.bf16.msra.mxu0 %v822
        %1294 = vmatprep.subr.bf16.mxu0 0
        %1295 = vmatpush1.bf16.msra.mxu0 0
        %1296 = vmatprep.subr.bf16.mxu0 0
        %1297 = vmatpush1.bf16.msra.mxu0 0
        %1298 = vmatprep.subr.bf16.mxu0 0
        %1299 = vmatpush1.bf16.msra.mxu0 0
        %1300 = vmatprep.subr.bf16.mxu0 0
        %1301 = vmatpush1.bf16.msra.mxu0 0
        %1302 = vmatprep.subr.bf16.mxu0 0
        %1303 = vmatpush1.bf16.msra.mxu0 0
        %1304 = vmatprep.subr.bf16.mxu0 0
        %1305 = vmatpush1.bf16.msra.mxu0 0
        %1306 = vmatprep.subr.bf16.mxu0 0
        %1307 = vmatpush1.bf16.msra.mxu0 0
        %1308 = vmatprep.subr.bf16.mxu0 0
        %1309 = vmatpush1.bf16.msra.mxu0 0
        %1310 = vmatprep.subr.bf16.mxu0 0
        %1311 = vmatpush1.bf16.msra.mxu0 0
        %1312 = vmatprep.subr.bf16.mxu0 0
        %1313 = vmatpush1.bf16.msra.mxu0 0
        %1314 = vmatprep.subr.bf16.mxu0 0
        %1315 = vmatpush1.bf16.msra.mxu0 0
        %1316 = vmatprep.subr.bf16.mxu0 0
        %1317 = vmatpush1.bf16.msra.mxu0 0
        %1318 = vmatprep.subr.bf16.mxu0 0
        %1319 = vmatpush1.bf16.msra.mxu0 0
        %1320 = vmatprep.subr.bf16.mxu0 0
        %1321 = vmatpush1.bf16.msra.mxu0 0
        %1322 = vmatprep.mubr.bf16.mxu0 0
        %1323 = vmatmul.mubr.bf16.gmra.mrb[0].mxu0 %v1285
        %v1324 = vpop.f32.mrb[0].mxu0
        %v1325 = vadd.f32 %v1270, %v1324
        %v1326 = vpop.f32.mrb[0].mxu0
        %v1327 = vpop.f32.mrb[0].mxu0
        %v1328 = vadd.f32 %v1273, %v1327
        %v1329 = vpop.f32.mrb[0].mxu0
        %1330 = vmatprep.mubr.bf16.mxu0 0
        %1331 = vmatmul.mubr.bf16.gmra.mrb[0].mxu0 %v1288
        %v1332 = vpop.f32.mrb[0].mxu0
        %v1333 = vadd.f32 %v1278, %v1332
        %v1334 = vpop.f32.mrb[0].mxu0
        %v1335 = vpop.f32.mrb[0].mxu0
        %v1336 = vadd.f32 %v1281, %v1335
        %v1337 = vpop.f32.mrb[0].mxu0
        %1338 = vdwg.mxu0
        %v1339 = vadd.f32 %v1325, %v468
        %v1340 = vadd.f32 %v1328, %v468
        %v1341 = vadd.f32 %v1333, %v468
        %v1342 = vadd.f32 %v1336, %v468
        %v1343 = vxor.u32 %v1339, 2147483648
        %v1344 = vxor.u32 %v1340, 2147483648
        %v1345 = vxor.u32 %v1341, 2147483648
        %v1346 = vxor.u32 %v1342, 2147483648
        %v1347 = vmul.f32 %v1343, 1.442695
        %v1348 = vpow.pop %v1347
        %v1349 = vmul.f32 %v1344, 1.442695
        %v1350 = vpow.pop %v1349
        %v1351 = vmul.f32 %v1345, 1.442695
        %v1352 = vpow.pop %v1351
        %v1353 = vmul.f32 %v1346, 1.442695
        %v1354 = vpow.pop %v1353
        %v1355 = vadd.f32 %v1348, 1.0
        %v1356 = vadd.f32 %v1350, 1.0
        %v1357 = vadd.f32 %v1352, 1.0
        %v1358 = vadd.f32 %v1354, 1.0
        %v1359 = vrcp.pop %v1355
        %v1360 = vmul.f32 1.0, %v1359
        %v1361 = vrcp.pop %v1356
        %v1362 = vmul.f32 1.0, %v1361
        %v1363 = vrcp.pop %v1357
        %v1364 = vmul.f32 1.0, %v1363
        %v1365 = vrcp.pop %v1358
        %v1366 = vmul.f32 1.0, %v1365
        %1371 = vrot.lane.b32.xlu0 %v1039, 32
        %v1372 = vpop.permute.xlu0 %1371
        %1373 = vrot.lane.b32.xlu0 %v1040, 32
        %v1374 = vpop.permute.xlu0 %1373
        %1375 = vrot.lane.b32.xlu0 %v1041, 32
        %v1376 = vpop.permute.xlu0 %1375
        %1377 = vrot.lane.b32.xlu0 %v1042, 32
        %v1378 = vpop.permute.xlu0 %1377
        %v1383 = vmul.f32 %v1360, %v1372
        %v1384 = vmul.f32 %v1362, %v1374
        %v1385 = vmul.f32 %v1364, %v1376
        %v1386 = vmul.f32 %v1366, %v1378
        %v1387 = vpack.c.bf16 %v1384, %v1383
        %v1388 = vpack.c.bf16 %v1386, %v1385
        %1391 = vrot.lane.b32.xlu0 %v1387, 96
        %v1392 = vpop.permute.xlu0 %1391
        %1393 = vrot.lane.b32.xlu0 %v1388, 96
        %v1394 = vpop.permute.xlu0 %1393
        %1399 = vrot.lane.b32.xlu0 %v1270, 64
        %v1400 = vpop.permute.xlu0 %1399
        %1401 = vrot.lane.b32.xlu0 %v1273, 64
        %v1402 = vpop.permute.xlu0 %1401
        %1403 = vrot.lane.b32.xlu0 %v1278, 64
        %v1404 = vpop.permute.xlu0 %1403
        %1405 = vrot.lane.b32.xlu0 %v1281, 64
        %v1406 = vpop.permute.xlu0 %1405
        %v1412 = vsel %vm757, %v1392, 0
        %v1415 = vsel %vm757, %v1394, 0
        %1417 = vmatprep.subr.bf16.mxu0 0
        %1418 = vmatpush1.bf16.msra.mxu0 %v944
        %1419 = vmatprep.subr.bf16.mxu0 0
        %1420 = vmatpush1.bf16.msra.mxu0 %v945
        %1421 = vmatprep.subr.bf16.mxu0 0
        %1422 = vmatpush1.bf16.msra.mxu0 0
        %1423 = vmatprep.subr.bf16.mxu0 0
        %1424 = vmatpush1.bf16.msra.mxu0 0
        %1425 = vmatprep.subr.bf16.mxu0 0
        %1426 = vmatpush1.bf16.msra.mxu0 0
        %1427 = vmatprep.subr.bf16.mxu0 0
        %1428 = vmatpush1.bf16.msra.mxu0 0
        %1429 = vmatprep.subr.bf16.mxu0 0
        %1430 = vmatpush1.bf16.msra.mxu0 0
        %1431 = vmatprep.subr.bf16.mxu0 0
        %1432 = vmatpush1.bf16.msra.mxu0 0
        %1433 = vmatprep.subr.bf16.mxu0 0
        %1434 = vmatpush1.bf16.msra.mxu0 0
        %1435 = vmatprep.subr.bf16.mxu0 0
        %1436 = vmatpush1.bf16.msra.mxu0 0
        %1437 = vmatprep.subr.bf16.mxu0 0
        %1438 = vmatpush1.bf16.msra.mxu0 0
        %1439 = vmatprep.subr.bf16.mxu0 0
        %1440 = vmatpush1.bf16.msra.mxu0 0
        %1441 = vmatprep.subr.bf16.mxu0 0
        %1442 = vmatpush1.bf16.msra.mxu0 0
        %1443 = vmatprep.subr.bf16.mxu0 0
        %1444 = vmatpush1.bf16.msra.mxu0 0
        %1445 = vmatprep.subr.bf16.mxu0 0
        %1446 = vmatpush1.bf16.msra.mxu0 0
        %1447 = vmatprep.subr.bf16.mxu0 0
        %1448 = vmatpush1.bf16.msra.mxu0 0
        %1449 = vmatprep.mubr.bf16.mxu0 0
        %1450 = vmatmul.mubr.bf16.gmra.mrb[0].mxu0 %v1412
        %v1451 = vpop.f32.mrb[0].mxu0
        %v1452 = vadd.f32 %v1400, %v1451
        %v1453 = vpop.f32.mrb[0].mxu0
        %v1454 = vpop.f32.mrb[0].mxu0
        %v1455 = vadd.f32 %v1402, %v1454
        %v1456 = vpop.f32.mrb[0].mxu0
        %1457 = vmatprep.mubr.bf16.mxu0 0
        %1458 = vmatmul.mubr.bf16.gmra.mrb[0].mxu0 %v1415
        %v1459 = vpop.f32.mrb[0].mxu0
        %v1460 = vadd.f32 %v1404, %v1459
        %v1461 = vpop.f32.mrb[0].mxu0
        %v1462 = vpop.f32.mrb[0].mxu0
        %v1463 = vadd.f32 %v1406, %v1462
        %v1464 = vpop.f32.mrb[0].mxu0
        %1465 = vdwg.mxu0
        %v1466 = vadd.f32 %v1452, %v475
        %v1467 = vadd.f32 %v1455, %v475
        %v1468 = vadd.f32 %v1460, %v475
        %v1469 = vadd.f32 %v1463, %v475
        %v1470 = vtanh.pop %v1466
        %v1471 = vtanh.pop %v1467
        %v1472 = vtanh.pop %v1468
        %v1473 = vtanh.pop %v1469
        %v1474 = vmul.f32 %v1360, %v1039
        %v1475 = vmul.f32 %v1362, %v1040
        %v1476 = vmul.f32 %v1364, %v1041
        %v1477 = vmul.f32 %v1366, %v1042
        %v1478 = vsub.f32 1.0, %v1360
        %v1479 = vsub.f32 1.0, %v1362
        %v1480 = vsub.f32 1.0, %v1364
        %v1481 = vsub.f32 1.0, %v1366
        %v1482 = vmul.f32 %v1478, %v1470
        %v1483 = vmul.f32 %v1479, %v1471
        %v1484 = vmul.f32 %v1480, %v1472
        %v1485 = vmul.f32 %v1481, %v1473
        %v1486 = vadd.f32 %v1474, %v1482
        %v1487 = vadd.f32 %v1475, %v1483
        %v1488 = vadd.f32 %v1476, %v1484
        %v1489 = vadd.f32 %v1477, %v1485
        %v1490 = vpack.c.bf16 %v1487, %v1486
        %v1491 = vpack.c.bf16 %v1489, %v1488
        %v1494 = vunpack.c.l.b16 %v1490
        %v1495 = vunpack.c.h.b16 %v1490
        %v1496 = vunpack.c.l.b16 %v1491
        %v1497 = vunpack.c.h.b16 %v1491
        %v1498 = vpack.c.b16 %v1494, %v1494
        %v1499 = vpack.c.b16 %v1495, %v1495
        %v1500 = vpack.c.b16 %v1496, %v1496
        %v1501 = vpack.c.b16 %v1497, %v1497
        %v1503 = vsel %vm561, %v1498, 0
        %1505 = vmatprep.subr.bf16.mxu0 0
        %1506 = vmatpush1.bf16.msra.mxu0 %v1503
        %1507 = vmatprep.subr.bf16.mxu0 0
        %1508 = vmatpush1.bf16.msra.mxu0 0
        %1509 = vmatprep.subr.bf16.mxu0 0
        %1510 = vmatpush1.bf16.msra.mxu0 0
        %1511 = vmatprep.subr.bf16.mxu0 0
        %1512 = vmatpush1.bf16.msra.mxu0 0
        %1513 = vmatprep.subr.bf16.mxu0 0
        %1514 = vmatpush1.bf16.msra.mxu0 0
        %1515 = vmatprep.subr.bf16.mxu0 0
        %1516 = vmatpush1.bf16.msra.mxu0 0
        %1517 = vmatprep.subr.bf16.mxu0 0
        %1518 = vmatpush1.bf16.msra.mxu0 0
        %1519 = vmatprep.subr.bf16.mxu0 0
        %1520 = vmatpush1.bf16.msra.mxu0 0
        %1521 = vmatprep.subr.bf16.mxu0 0
        %1522 = vmatpush1.bf16.msra.mxu0 0
        %1523 = vmatprep.subr.bf16.mxu0 0
        %1524 = vmatpush1.bf16.msra.mxu0 0
        %1525 = vmatprep.subr.bf16.mxu0 0
        %1526 = vmatpush1.bf16.msra.mxu0 0
        %1527 = vmatprep.subr.bf16.mxu0 0
        %1528 = vmatpush1.bf16.msra.mxu0 0
        %1529 = vmatprep.subr.bf16.mxu0 0
        %1530 = vmatpush1.bf16.msra.mxu0 0
        %1531 = vmatprep.subr.bf16.mxu0 0
        %1532 = vmatpush1.bf16.msra.mxu0 0
        %1533 = vmatprep.subr.bf16.mxu0 0
        %1534 = vmatpush1.bf16.msra.mxu0 0
        %1535 = vmatprep.subr.bf16.mxu0 0
        %1536 = vmatpush1.bf16.msra.mxu0 0
        %1537 = vmatprep.mubr.bf16.mxu0 0
        %1538 = vmatmul.mubr.bf16.gmra.mrb[0].mxu0 %v559
        %v1539 = vpop.f32.mrb[0].mxu0
        %v1540 = vadd.f32 0.0, %v1539
        %v1541 = vpop.f32.mrb[0].mxu0
        %v1542 = vpop.f32.mrb[0].mxu0
        %v1543 = vpop.f32.mrb[0].mxu0
        %1544 = vdwg.mxu0
        %v1546 = vsel %vm561, %v1499, 0
        %1548 = vmatprep.subr.bf16.mxu0 0
        %1549 = vmatpush1.bf16.msra.mxu0 %v1546
        %1550 = vmatprep.subr.bf16.mxu0 0
        %1551 = vmatpush1.bf16.msra.mxu0 0
        %1552 = vmatprep.subr.bf16.mxu0 0
        %1553 = vmatpush1.bf16.msra.mxu0 0
        %1554 = vmatprep.subr.bf16.mxu0 0
        %1555 = vmatpush1.bf16.msra.mxu0 0
        %1556 = vmatprep.subr.bf16.mxu0 0
        %1557 = vmatpush1.bf16.msra.mxu0 0
        %1558 = vmatprep.subr.bf16.mxu0 0
        %1559 = vmatpush1.bf16.msra.mxu0 0
        %1560 = vmatprep.subr.bf16.mxu0 0
        %1561 = vmatpush1.bf16.msra.mxu0 0
        %1562 = vmatprep.subr.bf16.mxu0 0
        %1563 = vmatpush1.bf16.msra.mxu0 0
        %1564 = vmatprep.subr.bf16.mxu0 0
        %1565 = vmatpush1.bf16.msra.mxu0 0
        %1566 = vmatprep.subr.bf16.mxu0 0
        %1567 = vmatpush1.bf16.msra.mxu0 0
        %1568 = vmatprep.subr.bf16.mxu0 0
        %1569 = vmatpush1.bf16.msra.mxu0 0
        %1570 = vmatprep.subr.bf16.mxu0 0
        %1571 = vmatpush1.bf16.msra.mxu0 0
        %1572 = vmatprep.subr.bf16.mxu0 0
        %1573 = vmatpush1.bf16.msra.mxu0 0
        %1574 = vmatprep.subr.bf16.mxu0 0
        %1575 = vmatpush1.bf16.msra.mxu0 0
        %1576 = vmatprep.subr.bf16.mxu0 0
        %1577 = vmatpush1.bf16.msra.mxu0 0
        %1578 = vmatprep.subr.bf16.mxu0 0
        %1579 = vmatpush1.bf16.msra.mxu0 0
        %1580 = vmatprep.mubr.bf16.mxu0 0
        %1581 = vmatmul.mubr.bf16.gmra.mrb[0].mxu0 %v606
        %v1582 = vpop.f32.mrb[0].mxu0
        %v1583 = vadd.f32 0.0, %v1582
        %v1584 = vpop.f32.mrb[0].mxu0
        %v1585 = vpop.f32.mrb[0].mxu0
        %v1586 = vpop.f32.mrb[0].mxu0
        %1587 = vdwg.mxu0
        %v1589 = vsel %vm561, %v1500, 0
        %1591 = vmatprep.subr.bf16.mxu0 0
        %1592 = vmatpush1.bf16.msra.mxu0 %v1589
        %1593 = vmatprep.subr.bf16.mxu0 0
        %1594 = vmatpush1.bf16.msra.mxu0 0
        %1595 = vmatprep.subr.bf16.mxu0 0
        %1596 = vmatpush1.bf16.msra.mxu0 0
        %1597 = vmatprep.subr.bf16.mxu0 0
        %1598 = vmatpush1.bf16.msra.mxu0 0
        %1599 = vmatprep.subr.bf16.mxu0 0
        %1600 = vmatpush1.bf16.msra.mxu0 0
        %1601 = vmatprep.subr.bf16.mxu0 0
        %1602 = vmatpush1.bf16.msra.mxu0 0
        %1603 = vmatprep.subr.bf16.mxu0 0
        %1604 = vmatpush1.bf16.msra.mxu0 0
        %1605 = vmatprep.subr.bf16.mxu0 0
        %1606 = vmatpush1.bf16.msra.mxu0 0
        %1607 = vmatprep.subr.bf16.mxu0 0
        %1608 = vmatpush1.bf16.msra.mxu0 0
        %1609 = vmatprep.subr.bf16.mxu0 0
        %1610 = vmatpush1.bf16.msra.mxu0 0
        %1611 = vmatprep.subr.bf16.mxu0 0
        %1612 = vmatpush1.bf16.msra.mxu0 0
        %1613 = vmatprep.subr.bf16.mxu0 0
        %1614 = vmatpush1.bf16.msra.mxu0 0
        %1615 = vmatprep.subr.bf16.mxu0 0
        %1616 = vmatpush1.bf16.msra.mxu0 0
        %1617 = vmatprep.subr.bf16.mxu0 0
        %1618 = vmatpush1.bf16.msra.mxu0 0
        %1619 = vmatprep.subr.bf16.mxu0 0
        %1620 = vmatpush1.bf16.msra.mxu0 0
        %1621 = vmatprep.subr.bf16.mxu0 0
        %1622 = vmatpush1.bf16.msra.mxu0 0
        %1623 = vmatprep.mubr.bf16.mxu0 0
        %1624 = vmatmul.mubr.bf16.gmra.mrb[0].mxu0 %v652
        %v1625 = vpop.f32.mrb[0].mxu0
        %v1626 = vadd.f32 0.0, %v1625
        %v1627 = vpop.f32.mrb[0].mxu0
        %v1628 = vpop.f32.mrb[0].mxu0
        %v1629 = vpop.f32.mrb[0].mxu0
        %1630 = vdwg.mxu0
        %v1632 = vsel %vm561, %v1501, 0
        %1634 = vmatprep.subr.bf16.mxu0 0
        %1635 = vmatpush1.bf16.msra.mxu0 %v1632
        %1636 = vmatprep.subr.bf16.mxu0 0
        %1637 = vmatpush1.bf16.msra.mxu0 0
        %1638 = vmatprep.subr.bf16.mxu0 0
        %1639 = vmatpush1.bf16.msra.mxu0 0
        %1640 = vmatprep.subr.bf16.mxu0 0
        %1641 = vmatpush1.bf16.msra.mxu0 0
        %1642 = vmatprep.subr.bf16.mxu0 0
        %1643 = vmatpush1.bf16.msra.mxu0 0
        %1644 = vmatprep.subr.bf16.mxu0 0
        %1645 = vmatpush1.bf16.msra.mxu0 0
        %1646 = vmatprep.subr.bf16.mxu0 0
        %1647 = vmatpush1.bf16.msra.mxu0 0
        %1648 = vmatprep.subr.bf16.mxu0 0
        %1649 = vmatpush1.bf16.msra.mxu0 0
        %1650 = vmatprep.subr.bf16.mxu0 0
        %1651 = vmatpush1.bf16.msra.mxu0 0
        %1652 = vmatprep.subr.bf16.mxu0 0
        %1653 = vmatpush1.bf16.msra.mxu0 0
        %1654 = vmatprep.subr.bf16.mxu0 0
        %1655 = vmatpush1.bf16.msra.mxu0 0
        %1656 = vmatprep.subr.bf16.mxu0 0
        %1657 = vmatpush1.bf16.msra.mxu0 0
        %1658 = vmatprep.subr.bf16.mxu0 0
        %1659 = vmatpush1.bf16.msra.mxu0 0
        %1660 = vmatprep.subr.bf16.mxu0 0
        %1661 = vmatpush1.bf16.msra.mxu0 0
        %1662 = vmatprep.subr.bf16.mxu0 0
        %1663 = vmatpush1.bf16.msra.mxu0 0
        %1664 = vmatprep.subr.bf16.mxu0 0
        %1665 = vmatpush1.bf16.msra.mxu0 0
        %1666 = vmatprep.mubr.bf16.mxu0 0
        %1667 = vmatmul.mubr.bf16.gmra.mrb[0].mxu0 %v698
        %v1668 = vpop.f32.mrb[0].mxu0
        %v1669 = vadd.f32 0.0, %v1668
        %v1670 = vpop.f32.mrb[0].mxu0
        %v1671 = vpop.f32.mrb[0].mxu0
        %v1672 = vpop.f32.mrb[0].mxu0
        %1673 = vdwg.mxu0
        %v1674 = vpack.c.bf16 %v1583, %v1540
        %v1675 = vpack.c.bf16 %v1669, %v1626
        %v1677 = vsel %vm757, %v1674, 0
        %v1680 = vsel %vm757, %v1675, 0
        %1682 = vmatprep.subr.bf16.mxu0 0
        %1683 = vmatpush1.bf16.msra.mxu0 %v753
        %1684 = vmatprep.subr.bf16.mxu0 0
        %1685 = vmatpush1.bf16.msra.mxu0 %v754
        %1686 = vmatprep.subr.bf16.mxu0 0
        %1687 = vmatpush1.bf16.msra.mxu0 0
        %1688 = vmatprep.subr.bf16.mxu0 0
        %1689 = vmatpush1.bf16.msra.mxu0 0
        %1690 = vmatprep.subr.bf16.mxu0 0
        %1691 = vmatpush1.bf16.msra.mxu0 0
        %1692 = vmatprep.subr.bf16.mxu0 0
        %1693 = vmatpush1.bf16.msra.mxu0 0
        %1694 = vmatprep.subr.bf16.mxu0 0
        %1695 = vmatpush1.bf16.msra.mxu0 0
        %1696 = vmatprep.subr.bf16.mxu0 0
        %1697 = vmatpush1.bf16.msra.mxu0 0
        %1698 = vmatprep.subr.bf16.mxu0 0
        %1699 = vmatpush1.bf16.msra.mxu0 0
        %1700 = vmatprep.subr.bf16.mxu0 0
        %1701 = vmatpush1.bf16.msra.mxu0 0
        %1702 = vmatprep.subr.bf16.mxu0 0
        %1703 = vmatpush1.bf16.msra.mxu0 0
        %1704 = vmatprep.subr.bf16.mxu0 0
        %1705 = vmatpush1.bf16.msra.mxu0 0
        %1706 = vmatprep.subr.bf16.mxu0 0
        %1707 = vmatpush1.bf16.msra.mxu0 0
        %1708 = vmatprep.subr.bf16.mxu0 0
        %1709 = vmatpush1.bf16.msra.mxu0 0
        %1710 = vmatprep.subr.bf16.mxu0 0
        %1711 = vmatpush1.bf16.msra.mxu0 0
        %1712 = vmatprep.subr.bf16.mxu0 0
        %1713 = vmatpush1.bf16.msra.mxu0 0
        %1714 = vmatprep.mubr.bf16.mxu0 0
        %1715 = vmatmul.mubr.bf16.gmra.mrb[0].mxu0 %v1677
        %v1716 = vpop.f32.mrb[0].mxu0
        %v1717 = vadd.f32 0.0, %v1716
        %v1718 = vpop.f32.mrb[0].mxu0
        %v1719 = vpop.f32.mrb[0].mxu0
        %v1720 = vadd.f32 0.0, %v1719
        %v1721 = vpop.f32.mrb[0].mxu0
        %1722 = vmatprep.mubr.bf16.mxu0 0
        %1723 = vmatmul.mubr.bf16.gmra.mrb[0].mxu0 %v1680
        %v1724 = vpop.f32.mrb[0].mxu0
        %v1725 = vadd.f32 0.0, %v1724
        %v1726 = vpop.f32.mrb[0].mxu0
        %v1727 = vpop.f32.mrb[0].mxu0
        %v1728 = vadd.f32 0.0, %v1727
        %v1729 = vpop.f32.mrb[0].mxu0
        %1730 = vdwg.mxu0
        %v1732 = vsel %vm757, %v1490, 0
        %v1735 = vsel %vm757, %v1491, 0
        %1737 = vmatprep.subr.bf16.mxu0 0
        %1738 = vmatpush1.bf16.msra.mxu0 %v821
        %1739 = vmatprep.subr.bf16.mxu0 0
        %1740 = vmatpush1.bf16.msra.mxu0 %v822
        %1741 = vmatprep.subr.bf16.mxu0 0
        %1742 = vmatpush1.bf16.msra.mxu0 0
        %1743 = vmatprep.subr.bf16.mxu0 0
        %1744 = vmatpush1.bf16.msra.mxu0 0
        %1745 = vmatprep.subr.bf16.mxu0 0
        %1746 = vmatpush1.bf16.msra.mxu0 0
        %1747 = vmatprep.subr.bf16.mxu0 0
        %1748 = vmatpush1.bf16.msra.mxu0 0
        %1749 = vmatprep.subr.bf16.mxu0 0
        %1750 = vmatpush1.bf16.msra.mxu0 0
        %1751 = vmatprep.subr.bf16.mxu0 0
        %1752 = vmatpush1.bf16.msra.mxu0 0
        %1753 = vmatprep.subr.bf16.mxu0 0
        %1754 = vmatpush1.bf16.msra.mxu0 0
        %1755 = vmatprep.subr.bf16.mxu0 0
        %1756 = vmatpush1.bf16.msra.mxu0 0
        %1757 = vmatprep.subr.bf16.mxu0 0
        %1758 = vmatpush1.bf16.msra.mxu0 0
        %1759 = vmatprep.subr.bf16.mxu0 0
        %1760 = vmatpush1.bf16.msra.mxu0 0
        %1761 = vmatprep.subr.bf16.mxu0 0
        %1762 = vmatpush1.bf16.msra.mxu0 0
        %1763 = vmatprep.subr.bf16.mxu0 0
        %1764 = vmatpush1.bf16.msra.mxu0 0
        %1765 = vmatprep.subr.bf16.mxu0 0
        %1766 = vmatpush1.bf16.msra.mxu0 0
        %1767 = vmatprep.subr.bf16.mxu0 0
        %1768 = vmatpush1.bf16.msra.mxu0 0
        %1769 = vmatprep.mubr.bf16.mxu0 0
        %1770 = vmatmul.mubr.bf16.gmra.mrb[0].mxu0 %v1732
        %v1771 = vpop.f32.mrb[0].mxu0
        %v1772 = vadd.f32 %v1717, %v1771
        %v1773 = vpop.f32.mrb[0].mxu0
        %v1774 = vpop.f32.mrb[0].mxu0
        %v1775 = vadd.f32 %v1720, %v1774
        %v1776 = vpop.f32.mrb[0].mxu0
        %1777 = vmatprep.mubr.bf16.mxu0 0
        %1778 = vmatmul.mubr.bf16.gmra.mrb[0].mxu0 %v1735
        %v1779 = vpop.f32.mrb[0].mxu0
        %v1780 = vadd.f32 %v1725, %v1779
        %v1781 = vpop.f32.mrb[0].mxu0
        %v1782 = vpop.f32.mrb[0].mxu0
        %v1783 = vadd.f32 %v1728, %v1782
        %v1784 = vpop.f32.mrb[0].mxu0
        %1785 = vdwg.mxu0
        %v1786 = vadd.f32 %v1772, %v468
        %v1787 = vadd.f32 %v1775, %v468
        %v1788 = vadd.f32 %v1780, %v468
        %v1789 = vadd.f32 %v1783, %v468
        %v1790 = vxor.u32 %v1786, 2147483648
        %v1791 = vxor.u32 %v1787, 2147483648
        %v1792 = vxor.u32 %v1788, 2147483648
        %v1793 = vxor.u32 %v1789, 2147483648
        %v1794 = vmul.f32 %v1790, 1.442695
        %v1795 = vpow.pop %v1794
        %v1796 = vmul.f32 %v1791, 1.442695
        %v1797 = vpow.pop %v1796
        %v1798 = vmul.f32 %v1792, 1.442695
        %v1799 = vpow.pop %v1798
        %v1800 = vmul.f32 %v1793, 1.442695
        %v1801 = vpow.pop %v1800
        %v1802 = vadd.f32 %v1795, 1.0
        %v1803 = vadd.f32 %v1797, 1.0
        %v1804 = vadd.f32 %v1799, 1.0
        %v1805 = vadd.f32 %v1801, 1.0
        %v1806 = vrcp.pop %v1802
        %v1807 = vmul.f32 1.0, %v1806
        %v1808 = vrcp.pop %v1803
        %v1809 = vmul.f32 1.0, %v1808
        %v1810 = vrcp.pop %v1804
        %v1811 = vmul.f32 1.0, %v1810
        %v1812 = vrcp.pop %v1805
        %v1813 = vmul.f32 1.0, %v1812
        %1818 = vrot.lane.b32.xlu0 %v1486, 32
        %v1819 = vpop.permute.xlu0 %1818
        %1820 = vrot.lane.b32.xlu0 %v1487, 32
        %v1821 = vpop.permute.xlu0 %1820
        %1822 = vrot.lane.b32.xlu0 %v1488, 32
        %v1823 = vpop.permute.xlu0 %1822
        %1824 = vrot.lane.b32.xlu0 %v1489, 32
        %v1825 = vpop.permute.xlu0 %1824
        %v1830 = vmul.f32 %v1807, %v1819
        %v1831 = vmul.f32 %v1809, %v1821
        %v1832 = vmul.f32 %v1811, %v1823
        %v1833 = vmul.f32 %v1813, %v1825
        %v1834 = vpack.c.bf16 %v1831, %v1830
        %v1835 = vpack.c.bf16 %v1833, %v1832
        %1838 = vrot.lane.b32.xlu0 %v1834, 96
        %v1839 = vpop.permute.xlu0 %1838
        %1840 = vrot.lane.b32.xlu0 %v1835, 96
        %v1841 = vpop.permute.xlu0 %1840
        %1846 = vrot.lane.b32.xlu0 %v1717, 64
        %v1847 = vpop.permute.xlu0 %1846
        %1848 = vrot.lane.b32.xlu0 %v1720, 64
        %v1849 = vpop.permute.xlu0 %1848
        %1850 = vrot.lane.b32.xlu0 %v1725, 64
        %v1851 = vpop.permute.xlu0 %1850
        %1852 = vrot.lane.b32.xlu0 %v1728, 64
        %v1853 = vpop.permute.xlu0 %1852
        %v1859 = vsel %vm757, %v1839, 0
        %v1862 = vsel %vm757, %v1841, 0
        %1864 = vmatprep.subr.bf16.mxu0 0
        %1865 = vmatpush1.bf16.msra.mxu0 %v944
        %1866 = vmatprep.subr.bf16.mxu0 0
        %1867 = vmatpush1.bf16.msra.mxu0 %v945
        %1868 = vmatprep.subr.bf16.mxu0 0
        %1869 = vmatpush1.bf16.msra.mxu0 0
        %1870 = vmatprep.subr.bf16.mxu0 0
        %1871 = vmatpush1.bf16.msra.mxu0 0
        %1872 = vmatprep.subr.bf16.mxu0 0
        %1873 = vmatpush1.bf16.msra.mxu0 0
        %1874 = vmatprep.subr.bf16.mxu0 0
        %1875 = vmatpush1.bf16.msra.mxu0 0
        %1876 = vmatprep.subr.bf16.mxu0 0
        %1877 = vmatpush1.bf16.msra.mxu0 0
        %1878 = vmatprep.subr.bf16.mxu0 0
        %1879 = vmatpush1.bf16.msra.mxu0 0
        %1880 = vmatprep.subr.bf16.mxu0 0
        %1881 = vmatpush1.bf16.msra.mxu0 0
        %1882 = vmatprep.subr.bf16.mxu0 0
        %1883 = vmatpush1.bf16.msra.mxu0 0
        %1884 = vmatprep.subr.bf16.mxu0 0
        %1885 = vmatpush1.bf16.msra.mxu0 0
        %1886 = vmatprep.subr.bf16.mxu0 0
        %1887 = vmatpush1.bf16.msra.mxu0 0
        %1888 = vmatprep.subr.bf16.mxu0 0
        %1889 = vmatpush1.bf16.msra.mxu0 0
        %1890 = vmatprep.subr.bf16.mxu0 0
        %1891 = vmatpush1.bf16.msra.mxu0 0
        %1892 = vmatprep.subr.bf16.mxu0 0
        %1893 = vmatpush1.bf16.msra.mxu0 0
        %1894 = vmatprep.subr.bf16.mxu0 0
        %1895 = vmatpush1.bf16.msra.mxu0 0
        %1896 = vmatprep.mubr.bf16.mxu0 0
        %1897 = vmatmul.mubr.bf16.gmra.mrb[0].mxu0 %v1859
        %v1898 = vpop.f32.mrb[0].mxu0
        %v1899 = vadd.f32 %v1847, %v1898
        %v1900 = vpop.f32.mrb[0].mxu0
        %v1901 = vpop.f32.mrb[0].mxu0
        %v1902 = vadd.f32 %v1849, %v1901
        %v1903 = vpop.f32.mrb[0].mxu0
        %1904 = vmatprep.mubr.bf16.mxu0 0
        %1905 = vmatmul.mubr.bf16.gmra.mrb[0].mxu0 %v1862
        %v1906 = vpop.f32.mrb[0].mxu0
        %v1907 = vadd.f32 %v1851, %v1906
        %v1908 = vpop.f32.mrb[0].mxu0
        %v1909 = vpop.f32.mrb[0].mxu0
        %v1910 = vadd.f32 %v1853, %v1909
        %v1911 = vpop.f32.mrb[0].mxu0
        %1912 = vdwg.mxu0
        %v1913 = vadd.f32 %v1899, %v475
        %v1914 = vadd.f32 %v1902, %v475
        %v1915 = vadd.f32 %v1907, %v475
        %v1916 = vadd.f32 %v1910, %v475
        %v1917 = vtanh.pop %v1913
        %v1918 = vtanh.pop %v1914
        %v1919 = vtanh.pop %v1915
        %v1920 = vtanh.pop %v1916
        %v1921 = vmul.f32 %v1807, %v1486
        %v1922 = vmul.f32 %v1809, %v1487
        %v1923 = vmul.f32 %v1811, %v1488
        %v1924 = vmul.f32 %v1813, %v1489
        %v1925 = vsub.f32 1.0, %v1807
        %v1926 = vsub.f32 1.0, %v1809
        %v1927 = vsub.f32 1.0, %v1811
        %v1928 = vsub.f32 1.0, %v1813
        %v1929 = vmul.f32 %v1925, %v1917
        %v1930 = vmul.f32 %v1926, %v1918
        %v1931 = vmul.f32 %v1927, %v1919
        %v1932 = vmul.f32 %v1928, %v1920
        %v1933 = vadd.f32 %v1921, %v1929
        %v1934 = vadd.f32 %v1922, %v1930
        %v1935 = vadd.f32 %v1923, %v1931
        %v1936 = vadd.f32 %v1924, %v1932
        %1937 = vst.msk [vmem:[%s433] sm:$0xff] %vm757, %v1933
        %1938 = vst.msk [vmem:[%s433 + $0x8] sm:$0xff] %vm757, %v1934
        %1939 = vst.msk [vmem:[%s433 + $0x10] sm:$0xff] %vm757, %v1935
        %1940 = vst.msk [vmem:[%s433 + $0x18] sm:$0xff] %vm757, %v1936
        %s1941 = sand.u32 %s237, 1
        %s1942 = scalar_lea.sflag [#allocation4], %s1941
        %s1943 = sand.u32 %s237, 1
        %s1944 = smul.addr %s1943, 32
        %s1945 = scalar_lea.vmem [#allocation11], %s1944
        // Predicated region
        $region77: #{tpu_custom_call.1} parent=55 // pred_check
          %p1946 = pneg %p247
        $region78: #{tpu_custom_call.1} parent=55 // pred_check_branch
          %1948 = sbr.rel (%p1946) target = $region80
        $region79: #{tpu_custom_call.1} parent=55 // pred_region
          %s1949 = smul.u32 4, %s30
          %s1951 = ssub.s32 512, 512
          %1952 = vsyncadd %s1942, %s1951
          %s1953 = smul.addr %s1949, 128
          %s1954 = scalar_lea.hbm %s9, %s1953
          %s1955 = sshll.u32 %s1945, 4
          %s1956 = int_to_ptr.vmem [resolvable:$true] %s1955
          %1961 = dma.vmem_to_hbm [thread:$0]  %s1956, 512, %s1954, %s1942, 128, 128, 8
        $region80: #{tpu_custom_call.1} parent=55 // pred_fallthru
          _
      $region56: #{tpu_custom_call.1} parent=5 // pred_fallthru
        _
      %p1962 = scmp.le.s32.totalorder 2, %s25
      // Predicated region
      $region81: #{tpu_custom_call.1} parent=5 // pred_check
        %p1963 = pneg %p1962
      $region82: #{tpu_custom_call.1} parent=5 // pred_check_branch
        %1965 = sbr.rel (%p1963) target = $region84
      $region83: #{tpu_custom_call.1} parent=5 // pred_region
        %s1966 = ssub.s32 %s25, 2
        // Predicated region
        $region85: #{tpu_custom_call.1} parent=83 // pred_check
          %p1967 = pneg %p253
        $region86: #{tpu_custom_call.1} parent=83 // pred_check_branch
          %1969 = sbr.rel (%p1967) target = $region88
        $region87: #{tpu_custom_call.1} parent=83 // pred_region
          %s1970 = sand.u32 %s238, 1
          %s1971 = scalar_lea.sflag [#allocation4], %s1970
          %s1972 = sand.u32 %s238, 1
          %s1973 = smul.addr %s1972, 32
          %s1974 = scalar_lea.vmem [#allocation11], %s1973
          %1975 = dma.done %s1971, 512
        $region88: #{tpu_custom_call.1} parent=83 // pred_fallthru
          _
      $region84: #{tpu_custom_call.1} parent=5 // pred_fallthru
        _
    $region6: #{tpu_custom_call.1} parent=1 // loop_footer
      %s29 = sadd.s32 1, %s25
    $region7: #{tpu_custom_call.1} parent=1 // loop_footer_branch
      %24 = sbr.rel target = $region3
    $region8: #{tpu_custom_call.1} parent=1 // loop_exit
      _
    %1976 = vsyncpa [#allocation3], 1
    %s1977 = scalar_lea.sflag [#allocation3], 1
    %1978 = vsyncpa %s1977, 1
    %1979 = vsyncpa [#allocation6], 1
    %s1980 = scalar_lea.sflag [#allocation6], 1
    %1981 = vsyncpa %s1980, 1
    %1982 = vsyncpa [#allocation9], 1
    %1983 = vsyncpa [#allocation4], 1
    %s1984 = scalar_lea.sflag [#allocation4], 1
    %1985 = vsyncpa %s1984, 1

</llo_original>
